<compile_context>
chip_gen: v7x
topology: tpu7x:2x2x1
jax: 0.10.0
libtpu: 0.0.40
codegen_flags: <defaults>
</compile_context>

<pallas_src>
import functools
import math

import jax
import jax.numpy as jnp
import numpy as np
from jax.experimental import pallas as pl
from jax.experimental.pallas import tpu as pltpu


# ---------------------------------------------------------------------------
# Pallas kernels
# ---------------------------------------------------------------------------
def _lifting_stack_kernel(x_ref, *refs):
    """Fused 3-level lifting stack on one (tm, W*C) row tile.

    refs = [bw1, s1, b1, sel, bw2, s2, b2] * n_levels + [o_ref].
    Layout of every activation: channels-last flattened, column = w*C_out + c.
    All intermediates stay in VMEM / vregs.
    """
    o_ref = refs[-1]
    wrefs = refs[:-1]
    h = x_ref[...]                                             # (tm, W*C) f32
    for lvl in range(len(wrefs) // 7):
        bw1, s1, b1, sel, bw2, s2, b2 = wrefs[7 * lvl:7 * lvl + 7]
        # conv1 (1x3, padded with the last 2 columns of the original x) + BN + ReLU
        y1 = jnp.dot(h, bw1[...], preferred_element_type=jnp.float32)
        y1 = jnp.maximum(y1 * s1[...] + b1[...], 0.0)
        # x_odd tiled x5 along channels (exact 0/1 selection matmul), minus conv1 out
        xp = jnp.dot(h, sel[...], preferred_element_type=jnp.float32) - y1
        # conv2 (1x3, padded with x_pre's own last 2 columns) + BN + ReLU
        y2 = jnp.dot(xp, bw2[...], preferred_element_type=jnp.float32)
        y2 = jnp.maximum(y2 * s2[...] + b2[...], 0.0)
        h = y1 + y2                                            # x_upd
    o_ref[...] = h


def _maxpool_fc_kernel(x_ref, w_ref, b_ref, o_ref, *, n, hw):
    """AdaptiveMaxPool2d((1,1)) + Linear.

    x rows are grouped per sample (hw = H*W_final consecutive rows each);
    n (batch) is small, so unroll over samples with static slices only.
    """
    w = w_ref[...]
    b = b_ref[...]
    for i in range(n):
        pooled = jnp.max(x_ref[i * hw:(i + 1) * hw, :], axis=0, keepdims=True)
        o_ref[i:i + 1, :] = (
            jnp.dot(pooled, w, preferred_element_type=jnp.float32) + b)


# ---------------------------------------------------------------------------
# Wrappers
# ---------------------------------------------------------------------------
def _vmem_capacity_bytes():
    try:
        return int(pltpu.get_tpu_info().vmem_capacity_bytes)
    except Exception:
        return 64 << 20      # v7x-sized conservative fallback


def _pick_row_tile(m, max_width):
    """Largest multiple-of-8 row tile that fits comfortably in VMEM, but at
    least two blocks when possible so v7x's two TensorCores both get work."""
    row_bytes = 4 * 6 * max(max_width, 1)                 # in + out + intermediates
    cap = (_vmem_capacity_bytes() // 4) // row_bytes      # ~1/4 of VMEM for tiles
    cap = max(8, min(1024, cap)) // 8 * 8
    two_way = max(8, -(-((m + 1) // 2) // 8) * 8)         # ceil(m/2) rounded up to 8
    return min(cap, two_way)


def _lifting_stack(x_flat, level_weights):
    """x_flat: (M, W*C) channels-last rows -> (M, W_final*C_final)."""
    m, kin = x_flat.shape
    kout = level_weights[-1][4].shape[1]                  # last level's bw2 columns
    widths = [kin] + [lw[0].shape[1] for lw in level_weights]
    tm = _pick_row_tile(m, max(widths))
    mp = -(-m // tm) * tm
    if mp != m:
        x_flat = jnp.pad(x_flat, ((0, mp - m), (0, 0)))

    flat_w = [w for lw in level_weights for w in lw]
    in_specs = [pl.BlockSpec((tm, kin), lambda i: (i, 0))]
    in_specs += [pl.BlockSpec(w.shape, lambda i: (0, 0)) for w in flat_w]

    out = pl.pallas_call(
        _lifting_stack_kernel,
        out_shape=jax.ShapeDtypeStruct((mp, kout), jnp.float32),
        grid=(mp // tm,),
        in_specs=in_specs,
        out_specs=pl.BlockSpec((tm, kout), lambda i: (i, 0)),
        compiler_params=pltpu.CompilerParams(
            dimension_semantics=("parallel",)),
    )(x_flat, *flat_w)
    return out[:m]


def _maxpool_fc(feat_rows, fc_w, fc_b, *, n, hw):
    classes = fc_w.shape[1]
    kern = functools.partial(_maxpool_fc_kernel, n=n, hw=hw)
    return pl.pallas_call(
        kern,
        out_shape=jax.ShapeDtypeStruct((n, classes), jnp.float32),
        in_specs=[pl.BlockSpec(memory_space=pltpu.MemorySpace.VMEM)] * 3,
        out_specs=pl.BlockSpec(memory_space=pltpu.MemorySpace.VMEM),
    )(feat_rows, fc_w, fc_b.reshape(1, -1))


def lifting_net_forward(x, prep):
    """x: (N, C, H, W) NCHW.  Returns (logits, logits) like the torch module."""
    n, c, h, w = x.shape
    # single layout conversion at the front; everything after is channels-last flat rows
    x_flat = jnp.transpose(x, (0, 2, 3, 1)).reshape(n * h, w * c)
    feats = _lifting_stack(x_flat, prep["levels"])        # (n*h, wf*cf)
    cf = prep["fc_w"].shape[0]
    wf = feats.shape[1] // cf
    rows = feats.reshape(n * h * wf, cf)                  # free reshape
    logits = _maxpool_fc(rows, prep["fc_w"], prep["fc_b"], n=n, hw=h * wf)
    return logits, logits


# ---------------------------------------------------------------------------
# Parameter init (synthetic) and one-time banded-weight preparation
# ---------------------------------------------------------------------------
def _fold_bn(key, c_out, conv_bias):
    k1, k2, k3, k4 = jax.random.split(key, 4)
    gamma = 1.0 + 0.1 * jax.random.normal(k1, (c_out,), jnp.float32)
    beta = 0.1 * jax.random.normal(k2, (c_out,), jnp.float32)
    rmean = 0.05 * jax.random.normal(k3, (c_out,), jnp.float32)
    rvar = 1.0 + 0.1 * jax.random.uniform(k4, (c_out,), jnp.float32)
    scale = gamma / jnp.sqrt(rvar + 1e-5)
    bias = beta + (conv_bias - rmean) * scale
    return scale, bias


def init_params(key, in_planes=1, class_nums=3):
    """Weights in (tap, C_in, C_out) layout; torch equivalent is
    conv.weight (C_out, C_in, 1, 3) permuted to (3, C_in, C_out)."""
    levels = []
    c = in_planes
    for _ in range(3):
        co = c * 5
        key, kw1, kb1, kbn1, kw2, kb2, kbn2 = jax.random.split(key, 7)
        w1 = jax.random.normal(kw1, (3, c, co), jnp.float32) / math.sqrt(3 * c)
        cb1 = 0.1 * jax.random.normal(kb1, (co,), jnp.float32)
        s1, b1 = _fold_bn(kbn1, co, cb1)
        w2 = jax.random.normal(kw2, (3, co, co), jnp.float32) / math.sqrt(3 * co)
        cb2 = 0.1 * jax.random.normal(kb2, (co,), jnp.float32)
        s2, b2 = _fold_bn(kbn2, co, cb2)
        levels.append(dict(w1=w1, s1=s1, b1=b1, w2=w2, s2=s2, b2=b2))
        c = co
    key, kfw, kfb = jax.random.split(key, 3)
    fc_w = jax.random.normal(kfw, (125, class_nums), jnp.float32) / math.sqrt(125.0)
    fc_b = 0.1 * jax.random.normal(kfb, (class_nums,), jnp.float32)
    return dict(levels=levels, fc_w=fc_w, fc_b=fc_b)


def _band_conv1(w_taps, c, wo):
    """(1,3) conv over x_even padded with the last 2 columns of the ORIGINAL x,
    as a dense (wo*2c, wo*co) matrix over pair-merged channels-last rows."""
    w = np.asarray(w_taps, np.float32)                    # (3, c, co)
    co = w.shape[-1]
    bw = np.zeros((wo * 2 * c, wo * co), np.float32)
    for wout in range(wo):
        for k in range(3):
            j = wout + k                                  # position in x_even_p
            if j < wo:
                r0 = j * 2 * c                            # even half of pair j
            elif j == wo:
                r0 = (wo - 1) * 2 * c                     # x[W-2] (even of last pair)
            else:
                r0 = (wo - 1) * 2 * c + c                 # x[W-1] (odd of last pair)
            bw[r0:r0 + c, wout * co:(wout + 1) * co] += w[k]
    return jnp.asarray(bw)


def _band_sel5(c, wo):
    """torch.cat((x_odd,)*5, dim=1) as an exact 0/1 selection matrix."""
    co = 5 * c
    sel = np.zeros((wo * 2 * c, wo * co), np.float32)
    eye = np.eye(c, dtype=np.float32)
    for w in range(wo):
        for g in range(5):
            sel[w * 2 * c + c:(w + 1) * 2 * c,
                w * co + g * c:w * co + (g + 1) * c] = eye
    return jnp.asarray(sel)


def _band_conv2(w_taps, co, wo):
    """(1,3) conv over x_pre padded with its own last 2 columns."""
    w = np.asarray(w_taps, np.float32)                    # (3, co, co)
    bw = np.zeros((wo * co, wo * co), np.float32)
    for wout in range(wo):
        for k in range(3):
            j = wout + k
            if j >= wo:
                j -= 2                                    # pad cols Wo,Wo+1 -> Wo-2,Wo-1
            bw[j * co:(j + 1) * co, wout * co:(wout + 1) * co] += w[k]
    return jnp.asarray(bw)


def prepare_params(params, width):
    """One-time fold of per-tap weights into banded matmul form for input width."""
    levels = []
    w = width
    for lvl in params["levels"]:
        c, co = lvl["w1"].shape[1], lvl["w1"].shape[2]
        assert w % 2 == 0 and w // 2 >= 2, "spatial width must stay even and >= 4"
        wo = w // 2
        bw1 = _band_conv1(lvl["w1"], c, wo)
        sel = _band_sel5(c, wo)
        bw2 = _band_conv2(lvl["w2"], co, wo)
        s1 = jnp.tile(lvl["s1"], wo).reshape(1, wo * co)
        b1 = jnp.tile(lvl["b1"], wo).reshape(1, wo * co)
        s2 = jnp.tile(lvl["s2"], wo).reshape(1, wo * co)
        b2 = jnp.tile(lvl["b2"], wo).reshape(1, wo * co)
        levels.append((bw1, s1, b1, sel, bw2, s2, b2))
        w = wo
    return dict(levels=levels, fc_w=params["fc_w"], fc_b=params["fc_b"])


# ---------------------------------------------------------------------------
# Pure-JAX NCHW reference (mirrors the torch forward op-for-op, BN folded)
# ---------------------------------------------------------------------------
def _reference_forward(x, params):
    hp = jax.lax.Precision.HIGHEST
    for lvl in params["levels"]:
        w1, s1, b1 = lvl["w1"], lvl["s1"], lvl["b1"]
        w2, s2, b2 = lvl["w2"], lvl["s2"], lvl["b2"]
        wo = x.shape[-1] // 2
        x_even, x_odd = x[..., ::2], x[..., 1::2]
        xe = jnp.concatenate([x_even, x[..., -2:]], axis=-1)
        y1 = sum(jnp.einsum("nchw,cd->ndhw", xe[..., k:k + wo], w1[k], precision=hp)
                 for k in range(3))
        y1 = jnp.maximum(y1 * s1[None, :, None, None] + b1[None, :, None, None], 0.0)
        x_pre = jnp.concatenate([x_odd] * 5, axis=1) - y1
        xpp = jnp.concatenate([x_pre, x_pre[..., -2:]], axis=-1)
        y2 = sum(jnp.einsum("nchw,cd->ndhw", xpp[..., k:k + wo], w2[k], precision=hp)
                 for k in range(3))
        y2 = jnp.maximum(y2 * s2[None, :, None, None] + b2[None, :, None, None], 0.0)
        x = y1 + y2
    pooled = jnp.max(x, axis=(2, 3))
    return jnp.dot(pooled, params["fc_w"], precision=hp) + params["fc_b"]


# ---------------------------------------------------------------------------
if __name__ == "__main__":
    key = jax.random.PRNGKey(0)
    kx, kp = jax.random.split(key)

    # in_planes must be 1 so the final channel count (125*in_planes) matches the
    # fc's 125 input features (as in the torch module); W divisible by 8 for 3 halvings.
    N, C, H, W = 2, 1, 16, 16
    class_nums = 3

    x = jax.random.normal(kx, (N, C, H, W), jnp.float32)
    params = init_params(kp, in_planes=C, class_nums=class_nums)
    prep = prepare_params(params, W)

    fwd = jax.jit(lifting_net_forward)
    out1, out2 = fwd(x, prep)
    jax.block_until_ready(out1)
    jax.block_until_ready(out2)

    assert out1.shape == (N, class_nums)
    assert bool(jnp.all(jnp.isfinite(out1)))

    # cross-check the fused Pallas path against a straightforward JAX reference
    ref = _reference_forward(x, params)
    err = float(jnp.max(jnp.abs(out1 - ref)))
    tol = 5e-2 * (float(jnp.max(jnp.abs(ref))) + 1.0)
    assert err <= tol, f"mismatch vs reference: {err} > {tol}"

    print("KERNEL_OK")
</pallas_src>

<mosaic_0001>
module attributes {stable_mosaic.version = 11 : i64} {
  func.func @_maxpool_fc_kernel(%arg0: memref<64x125xf32, #tpu.memory_space<vmem>>, %arg1: memref<125x3xf32, #tpu.memory_space<vmem>>, %arg2: memref<1x3xf32, #tpu.memory_space<vmem>>, %arg3: memref<2x3xf32, #tpu.memory_space<vmem>>) attributes {dimension_semantics = [], scalar_prefetch = 0 : i64, scratch_operands = 0 : i64, tpu.core_type = #tpu.core_type<tc>} {
    %c0 = arith.constant 0 : index
    %c0_0 = arith.constant 0 : index
    %0 = vector.load %arg1[%c0, %c0_0] : memref<125x3xf32, #tpu.memory_space<vmem>>, vector<125x3xf32>
    %c0_1 = arith.constant 0 : index
    %c0_2 = arith.constant 0 : index
    %1 = vector.load %arg2[%c0_1, %c0_2] : memref<1x3xf32, #tpu.memory_space<vmem>>, vector<1x3xf32>
    %c0_3 = arith.constant 0 : index
    %c0_4 = arith.constant 0 : index
    %2 = vector.load %arg0[%c0_3, %c0_4] : memref<64x125xf32, #tpu.memory_space<vmem>>, vector<32x125xf32>
    %cst = arith.constant dense<0xFF800000> : vector<125xf32>
    %3 = vector.multi_reduction <maximumf>, %2, %cst [0] : vector<32x125xf32> to vector<125xf32>
    %4 = vector.shape_cast %3 : vector<125xf32> to vector<1x125xf32>
    %cst_5 = arith.constant dense<0.000000e+00> : vector<1x3xf32>
    %5 = tpu.matmul %4, %0, %cst_5 {dimension_numbers = #tpu.dot_dimension_numbers<[1], [0], [0], [1], [0, 0, 1, 1], [], []>} : vector<1x125xf32>, vector<125x3xf32>, vector<1x3xf32> -> vector<1x3xf32>
    %6 = arith.addf %5, %1 : vector<1x3xf32>
    %c0_6 = arith.constant 0 : index
    %c0_7 = arith.constant 0 : index
    %7 = vector.load %arg3[%c0_6, %c0_7] : memref<2x3xf32, #tpu.memory_space<vmem>>, vector<1x3xf32>
    tpu.vector_store %arg3[%c0_6, %c0_7], %6 {strides = array<i32>} : memref<2x3xf32, #tpu.memory_space<vmem>>, vector<1x3xf32>,
    %c32 = arith.constant 32 : index
    %c0_8 = arith.constant 0 : index
    %8 = vector.load %arg0[%c32, %c0_8] : memref<64x125xf32, #tpu.memory_space<vmem>>, vector<32x125xf32>
    %cst_9 = arith.constant dense<0xFF800000> : vector<125xf32>
    %9 = vector.multi_reduction <maximumf>, %8, %cst_9 [0] : vector<32x125xf32> to vector<125xf32>
    %10 = vector.shape_cast %9 : vector<125xf32> to vector<1x125xf32>
    %cst_10 = arith.constant dense<0.000000e+00> : vector<1x3xf32>
    %11 = tpu.matmul %10, %0, %cst_10 {dimension_numbers = #tpu.dot_dimension_numbers<[1], [0], [0], [1], [0, 0, 1, 1], [], []>} : vector<1x125xf32>, vector<125x3xf32>, vector<1x3xf32> -> vector<1x3xf32>
    %12 = arith.addf %11, %1 : vector<1x3xf32>
    %c1 = arith.constant 1 : index
    %c0_11 = arith.constant 0 : index
    %13 = vector.load %arg3[%c1, %c0_11] : memref<2x3xf32, #tpu.memory_space<vmem>>, vector<1x3xf32>
    tpu.vector_store %arg3[%c1, %c0_11], %12 {strides = array<i32>} : memref<2x3xf32, #tpu.memory_space<vmem>>, vector<1x3xf32>,
    return
  }
}

module attributes {stable_mosaic.version = 11 : i64} {
  func.func @_lifting_stack_kernel(%arg0: i32, %arg1: memref<16x16xf32, #tpu.memory_space<vmem>>, %arg2: memref<16x40xf32, #tpu.memory_space<vmem>>, %arg3: memref<1x40xf32, #tpu.memory_space<vmem>>, %arg4: memref<1x40xf32, #tpu.memory_space<vmem>>, %arg5: memref<16x40xf32, #tpu.memory_space<vmem>>, %arg6: memref<40x40xf32, #tpu.memory_space<vmem>>, %arg7: memref<1x40xf32, #tpu.memory_space<vmem>>, %arg8: memref<1x40xf32, #tpu.memory_space<vmem>>, %arg9: memref<40x100xf32, #tpu.memory_space<vmem>>, %arg10: memref<1x100xf32, #tpu.memory_space<vmem>>, %arg11: memref<1x100xf32, #tpu.memory_space<vmem>>, %arg12: memref<40x100xf32, #tpu.memory_space<vmem>>, %arg13: memref<100x100xf32, #tpu.memory_space<vmem>>, %arg14: memref<1x100xf32, #tpu.memory_space<vmem>>, %arg15: memref<1x100xf32, #tpu.memory_space<vmem>>, %arg16: memref<100x250xf32, #tpu.memory_space<vmem>>, %arg17: memref<1x250xf32, #tpu.memory_space<vmem>>, %arg18: memref<1x250xf32, #tpu.memory_space<vmem>>, %arg19: memref<100x250xf32, #tpu.memory_space<vmem>>, %arg20: memref<250x250xf32, #tpu.memory_space<vmem>>, %arg21: memref<1x250xf32, #tpu.memory_space<vmem>>, %arg22: memref<1x250xf32, #tpu.memory_space<vmem>>, %arg23: memref<16x250xf32, #tpu.memory_space<vmem>>) attributes {dimension_semantics = [#tpu.dimension_semantics<parallel>], iteration_bounds = array<i64: 2>, scalar_prefetch = 0 : i64, scratch_operands = 0 : i64, tpu.core_type = #tpu.core_type<tc>, window_params = [{transform_indices = @transform_0, window_bounds = array<i64: 16, 16>}, {pipeline_mode = #tpu.pipeline_mode<synchronous>, transform_indices = @transform_1, window_bounds = array<i64: 16, 40>}, {pipeline_mode = #tpu.pipeline_mode<synchronous>, transform_indices = @transform_2, window_bounds = array<i64: 1, 40>}, {pipeline_mode = #tpu.pipeline_mode<synchronous>, transform_indices = @transform_3, window_bounds = array<i64: 1, 40>}, {pipeline_mode = #tpu.pipeline_mode<synchronous>, transform_indices = @transform_4, window_bounds = array<i64: 16, 40>}, {pipeline_mode = #tpu.pipeline_mode<synchronous>, transform_indices = @transform_5, window_bounds = array<i64: 40, 40>}, {pipeline_mode = #tpu.pipeline_mode<synchronous>, transform_indices = @transform_6, window_bounds = array<i64: 1, 40>}, {pipeline_mode = #tpu.pipeline_mode<synchronous>, transform_indices = @transform_7, window_bounds = array<i64: 1, 40>}, {pipeline_mode = #tpu.pipeline_mode<synchronous>, transform_indices = @transform_8, window_bounds = array<i64: 40, 100>}, {pipeline_mode = #tpu.pipeline_mode<synchronous>, transform_indices = @transform_9, window_bounds = array<i64: 1, 100>}, {pipeline_mode = #tpu.pipeline_mode<synchronous>, transform_indices = @transform_10, window_bounds = array<i64: 1, 100>}, {pipeline_mode = #tpu.pipeline_mode<synchronous>, transform_indices = @transform_11, window_bounds = array<i64: 40, 100>}, {pipeline_mode = #tpu.pipeline_mode<synchronous>, transform_indices = @transform_12, window_bounds = array<i64: 100, 100>}, {pipeline_mode = #tpu.pipeline_mode<synchronous>, transform_indices = @transform_13, window_bounds = array<i64: 1, 100>}, {pipeline_mode = #tpu.pipeline_mode<synchronous>, transform_indices = @transform_14, window_bounds = array<i64: 1, 100>}, {pipeline_mode = #tpu.pipeline_mode<synchronous>, transform_indices = @transform_15, window_bounds = array<i64: 100, 250>}, {pipeline_mode = #tpu.pipeline_mode<synchronous>, transform_indices = @transform_16, window_bounds = array<i64: 1, 250>}, {pipeline_mode = #tpu.pipeline_mode<synchronous>, transform_indices = @transform_17, window_bounds = array<i64: 1, 250>}, {pipeline_mode = #tpu.pipeline_mode<synchronous>, transform_indices = @transform_18, window_bounds = array<i64: 100, 250>}, {pipeline_mode = #tpu.pipeline_mode<synchronous>, transform_indices = @transform_19, window_bounds = array<i64: 250, 250>}, {pipeline_mode = #tpu.pipeline_mode<synchronous>, transform_indices = @transform_20, window_bounds = array<i64: 1, 250>}, {pipeline_mode = #tpu.pipeline_mode<synchronous>, transform_indices = @transform_21, window_bounds = array<i64: 1, 250>}, {transform_indices = @transform_22, window_bounds = array<i64: 16, 250>}]} {
    %c0 = arith.constant 0 : index
    %c0_0 = arith.constant 0 : index
    %0 = vector.load %arg1[%c0, %c0_0] : memref<16x16xf32, #tpu.memory_space<vmem>>, vector<16x16xf32>
    %c0_1 = arith.constant 0 : index
    %c0_2 = arith.constant 0 : index
    %1 = vector.load %arg2[%c0_1, %c0_2] : memref<16x40xf32, #tpu.memory_space<vmem>>, vector<16x40xf32>
    %cst = arith.constant dense<0.000000e+00> : vector<16x40xf32>
    %2 = tpu.matmul %0, %1, %cst {dimension_numbers = #tpu.dot_dimension_numbers<[1], [0], [0], [1], [0, 0, 1, 1], [], []>} : vector<16x16xf32>, vector<16x40xf32>, vector<16x40xf32> -> vector<16x40xf32>
    %c0_3 = arith.constant 0 : index
    %c0_4 = arith.constant 0 : index
    %3 = vector.load %arg3[%c0_3, %c0_4] : memref<1x40xf32, #tpu.memory_space<vmem>>, vector<1x40xf32>
    %4 = vector.broadcast %3 : vector<1x40xf32> to vector<16x40xf32>
    %5 = arith.mulf %2, %4 : vector<16x40xf32>
    %c0_5 = arith.constant 0 : index
    %c0_6 = arith.constant 0 : index
    %6 = vector.load %arg4[%c0_5, %c0_6] : memref<1x40xf32, #tpu.memory_space<vmem>>, vector<1x40xf32>
    %7 = vector.broadcast %6 : vector<1x40xf32> to vector<16x40xf32>
    %8 = arith.addf %5, %7 : vector<16x40xf32>
    %cst_7 = arith.constant 0.000000e+00 : f32
    %9 = vector.broadcast %cst_7 : f32 to vector<16x40xf32>
    %10 = arith.maximumf %8, %9 : vector<16x40xf32>
    %c0_8 = arith.constant 0 : index
    %c0_9 = arith.constant 0 : index
    %11 = vector.load %arg5[%c0_8, %c0_9] : memref<16x40xf32, #tpu.memory_space<vmem>>, vector<16x40xf32>
    %cst_10 = arith.constant dense<0.000000e+00> : vector<16x40xf32>
    %12 = tpu.matmul %0, %11, %cst_10 {dimension_numbers = #tpu.dot_dimension_numbers<[1], [0], [0], [1], [0, 0, 1, 1], [], []>} : vector<16x16xf32>, vector<16x40xf32>, vector<16x40xf32> -> vector<16x40xf32>
    %13 = arith.subf %12, %10 : vector<16x40xf32>
    %c0_11 = arith.constant 0 : index
    %c0_12 = arith.constant 0 : index
    %14 = vector.load %arg6[%c0_11, %c0_12] : memref<40x40xf32, #tpu.memory_space<vmem>>, vector<40x40xf32>
    %cst_13 = arith.constant dense<0.000000e+00> : vector<16x40xf32>
    %15 = tpu.matmul %13, %14, %cst_13 {dimension_numbers = #tpu.dot_dimension_numbers<[1], [0], [0], [1], [0, 0, 1, 1], [], []>} : vector<16x40xf32>, vector<40x40xf32>, vector<16x40xf32> -> vector<16x40xf32>
    %c0_14 = arith.constant 0 : index
    %c0_15 = arith.constant 0 : index
    %16 = vector.load %arg7[%c0_14, %c0_15] : memref<1x40xf32, #tpu.memory_space<vmem>>, vector<1x40xf32>
    %17 = vector.broadcast %16 : vector<1x40xf32> to vector<16x40xf32>
    %18 = arith.mulf %15, %17 : vector<16x40xf32>
    %c0_16 = arith.constant 0 : index
    %c0_17 = arith.constant 0 : index
    %19 = vector.load %arg8[%c0_16, %c0_17] : memref<1x40xf32, #tpu.memory_space<vmem>>, vector<1x40xf32>
    %20 = vector.broadcast %19 : vector<1x40xf32> to vector<16x40xf32>
    %21 = arith.addf %18, %20 : vector<16x40xf32>
    %cst_18 = arith.constant 0.000000e+00 : f32
    %22 = vector.broadcast %cst_18 : f32 to vector<16x40xf32>
    %23 = arith.maximumf %21, %22 : vector<16x40xf32>
    %24 = arith.addf %10, %23 : vector<16x40xf32>
    %c0_19 = arith.constant 0 : index
    %c0_20 = arith.constant 0 : index
    %25 = vector.load %arg9[%c0_19, %c0_20] : memref<40x100xf32, #tpu.memory_space<vmem>>, vector<40x100xf32>
    %cst_21 = arith.constant dense<0.000000e+00> : vector<16x100xf32>
    %26 = tpu.matmul %24, %25, %cst_21 {dimension_numbers = #tpu.dot_dimension_numbers<[1], [0], [0], [1], [0, 0, 1, 1], [], []>} : vector<16x40xf32>, vector<40x100xf32>, vector<16x100xf32> -> vector<16x100xf32>
    %c0_22 = arith.constant 0 : index
    %c0_23 = arith.constant 0 : index
    %27 = vector.load %arg10[%c0_22, %c0_23] : memref<1x100xf32, #tpu.memory_space<vmem>>, vector<1x100xf32>
    %28 = vector.broadcast %27 : vector<1x100xf32> to vector<16x100xf32>
    %29 = arith.mulf %26, %28 : vector<16x100xf32>
    %c0_24 = arith.constant 0 : index
    %c0_25 = arith.constant 0 : index
    %30 = vector.load %arg11[%c0_24, %c0_25] : memref<1x100xf32, #tpu.memory_space<vmem>>, vector<1x100xf32>
    %31 = vector.broadcast %30 : vector<1x100xf32> to vector<16x100xf32>
    %32 = arith.addf %29, %31 : vector<16x100xf32>
    %cst_26 = arith.constant 0.000000e+00 : f32
    %33 = vector.broadcast %cst_26 : f32 to vector<16x100xf32>
    %34 = arith.maximumf %32, %33 : vector<16x100xf32>
    %c0_27 = arith.constant 0 : index
    %c0_28 = arith.constant 0 : index
    %35 = vector.load %arg12[%c0_27, %c0_28] : memref<40x100xf32, #tpu.memory_space<vmem>>, vector<40x100xf32>
    %cst_29 = arith.constant dense<0.000000e+00> : vector<16x100xf32>
    %36 = tpu.matmul %24, %35, %cst_29 {dimension_numbers = #tpu.dot_dimension_numbers<[1], [0], [0], [1], [0, 0, 1, 1], [], []>} : vector<16x40xf32>, vector<40x100xf32>, vector<16x100xf32> -> vector<16x100xf32>
    %37 = arith.subf %36, %34 : vector<16x100xf32>
    %c0_30 = arith.constant 0 : index
    %c0_31 = arith.constant 0 : index
    %38 = vector.load %arg13[%c0_30, %c0_31] : memref<100x100xf32, #tpu.memory_space<vmem>>, vector<100x100xf32>
    %cst_32 = arith.constant dense<0.000000e+00> : vector<16x100xf32>
    %39 = tpu.matmul %37, %38, %cst_32 {dimension_numbers = #tpu.dot_dimension_numbers<[1], [0], [0], [1], [0, 0, 1, 1], [], []>} : vector<16x100xf32>, vector<100x100xf32>, vector<16x100xf32> -> vector<16x100xf32>
    %c0_33 = arith.constant 0 : index
    %c0_34 = arith.constant 0 : index
    %40 = vector.load %arg14[%c0_33, %c0_34] : memref<1x100xf32, #tpu.memory_space<vmem>>, vector<1x100xf32>
    %41 = vector.broadcast %40 : vector<1x100xf32> to vector<16x100xf32>
    %42 = arith.mulf %39, %41 : vector<16x100xf32>
    %c0_35 = arith.constant 0 : index
    %c0_36 = arith.constant 0 : index
    %43 = vector.load %arg15[%c0_35, %c0_36] : memref<1x100xf32, #tpu.memory_space<vmem>>, vector<1x100xf32>
    %44 = vector.broadcast %43 : vector<1x100xf32> to vector<16x100xf32>
    %45 = arith.addf %42, %44 : vector<16x100xf32>
    %cst_37 = arith.constant 0.000000e+00 : f32
    %46 = vector.broadcast %cst_37 : f32 to vector<16x100xf32>
    %47 = arith.maximumf %45, %46 : vector<16x100xf32>
    %48 = arith.addf %34, %47 : vector<16x100xf32>
    %c0_38 = arith.constant 0 : index
    %c0_39 = arith.constant 0 : index
    %49 = vector.load %arg16[%c0_38, %c0_39] : memref<100x250xf32, #tpu.memory_space<vmem>>, vector<100x250xf32>
    %cst_40 = arith.constant dense<0.000000e+00> : vector<16x250xf32>
    %50 = tpu.matmul %48, %49, %cst_40 {dimension_numbers = #tpu.dot_dimension_numbers<[1], [0], [0], [1], [0, 0, 1, 1], [], []>} : vector<16x100xf32>, vector<100x250xf32>, vector<16x250xf32> -> vector<16x250xf32>
    %c0_41 = arith.constant 0 : index
    %c0_42 = arith.constant 0 : index
    %51 = vector.load %arg17[%c0_41, %c0_42] : memref<1x250xf32, #tpu.memory_space<vmem>>, vector<1x250xf32>
    %52 = vector.broadcast %51 : vector<1x250xf32> to vector<16x250xf32>
    %53 = arith.mulf %50, %52 : vector<16x250xf32>
    %c0_43 = arith.constant 0 : index
    %c0_44 = arith.constant 0 : index
    %54 = vector.load %arg18[%c0_43, %c0_44] : memref<1x250xf32, #tpu.memory_space<vmem>>, vector<1x250xf32>
    %55 = vector.broadcast %54 : vector<1x250xf32> to vector<16x250xf32>
    %56 = arith.addf %53, %55 : vector<16x250xf32>
    %cst_45 = arith.constant 0.000000e+00 : f32
    %57 = vector.broadcast %cst_45 : f32 to vector<16x250xf32>
    %58 = arith.maximumf %56, %57 : vector<16x250xf32>
    %c0_46 = arith.constant 0 : index
    %c0_47 = arith.constant 0 : index
    %59 = vector.load %arg19[%c0_46, %c0_47] : memref<100x250xf32, #tpu.memory_space<vmem>>, vector<100x250xf32>
    %cst_48 = arith.constant dense<0.000000e+00> : vector<16x250xf32>
    %60 = tpu.matmul %48, %59, %cst_48 {dimension_numbers = #tpu.dot_dimension_numbers<[1], [0], [0], [1], [0, 0, 1, 1], [], []>} : vector<16x100xf32>, vector<100x250xf32>, vector<16x250xf32> -> vector<16x250xf32>
    %61 = arith.subf %60, %58 : vector<16x250xf32>
    %c0_49 = arith.constant 0 : index
    %c0_50 = arith.constant 0 : index
    %62 = vector.load %arg20[%c0_49, %c0_50] : memref<250x250xf32, #tpu.memory_space<vmem>>, vector<250x250xf32>
    %cst_51 = arith.constant dense<0.000000e+00> : vector<16x250xf32>
    %63 = tpu.matmul %61, %62, %cst_51 {dimension_numbers = #tpu.dot_dimension_numbers<[1], [0], [0], [1], [0, 0, 1, 1], [], []>} : vector<16x250xf32>, vector<250x250xf32>, vector<16x250xf32> -> vector<16x250xf32>
    %c0_52 = arith.constant 0 : index
    %c0_53 = arith.constant 0 : index
    %64 = vector.load %arg21[%c0_52, %c0_53] : memref<1x250xf32, #tpu.memory_space<vmem>>, vector<1x250xf32>
    %65 = vector.broadcast %64 : vector<1x250xf32> to vector<16x250xf32>
    %66 = arith.mulf %63, %65 : vector<16x250xf32>
    %c0_54 = arith.constant 0 : index
    %c0_55 = arith.constant 0 : index
    %67 = vector.load %arg22[%c0_54, %c0_55] : memref<1x250xf32, #tpu.memory_space<vmem>>, vector<1x250xf32>
    %68 = vector.broadcast %67 : vector<1x250xf32> to vector<16x250xf32>
    %69 = arith.addf %66, %68 : vector<16x250xf32>
    %cst_56 = arith.constant 0.000000e+00 : f32
    %70 = vector.broadcast %cst_56 : f32 to vector<16x250xf32>
    %71 = arith.maximumf %69, %70 : vector<16x250xf32>
    %72 = arith.addf %58, %71 : vector<16x250xf32>
    %c0_57 = arith.constant 0 : index
    %c0_58 = arith.constant 0 : index
    %73 = vector.load %arg23[%c0_57, %c0_58] : memref<16x250xf32, #tpu.memory_space<vmem>>, vector<16x250xf32>
    tpu.vector_store %arg23[%c0_57, %c0_58], %72 {strides = array<i32>} : memref<16x250xf32, #tpu.memory_space<vmem>>, vector<16x250xf32>,
    return
  }
  func.func @transform_0(%arg0: i32) -> (i32, i32) {
    %c0_i32 = arith.constant 0 : i32
    %c0_i32_0 = arith.constant 0 : i32
    return %arg0, %c0_i32 : i32, i32
  }
  func.func @transform_1(%arg0: i32) -> (i32, i32) {
    %c0_i32 = arith.constant 0 : i32
    %c0_i32_0 = arith.constant 0 : i32
    %c0_i32_1 = arith.constant 0 : i32
    return %c0_i32, %c0_i32_0 : i32, i32
  }
  func.func @transform_2(%arg0: i32) -> (i32, i32) {
    %c0_i32 = arith.constant 0 : i32
    %c0_i32_0 = arith.constant 0 : i32
    %c0_i32_1 = arith.constant 0 : i32
    return %c0_i32, %c0_i32_0 : i32, i32
  }
  func.func @transform_3(%arg0: i32) -> (i32, i32) {
    %c0_i32 = arith.constant 0 : i32
    %c0_i32_0 = arith.constant 0 : i32
    %c0_i32_1 = arith.constant 0 : i32
    return %c0_i32, %c0_i32_0 : i32, i32
  }
  func.func @transform_4(%arg0: i32) -> (i32, i32) {
    %c0_i32 = arith.constant 0 : i32
    %c0_i32_0 = arith.constant 0 : i32
    %c0_i32_1 = arith.constant 0 : i32
    return %c0_i32, %c0_i32_0 : i32, i32
  }
  func.func @transform_5(%arg0: i32) -> (i32, i32) {
    %c0_i32 = arith.constant 0 : i32
    %c0_i32_0 = arith.constant 0 : i32
    %c0_i32_1 = arith.constant 0 : i32
    return %c0_i32, %c0_i32_0 : i32, i32
  }
  func.func @transform_6(%arg0: i32) -> (i32, i32) {
    %c0_i32 = arith.constant 0 : i32
    %c0_i32_0 = arith.constant 0 : i32
    %c0_i32_1 = arith.constant 0 : i32
    return %c0_i32, %c0_i32_0 : i32, i32
  }
  func.func @transform_7(%arg0: i32) -> (i32, i32) {
    %c0_i32 = arith.constant 0 : i32
    %c0_i32_0 = arith.constant 0 : i32
    %c0_i32_1 = arith.constant 0 : i32
    return %c0_i32, %c0_i32_0 : i32, i32
  }
  func.func @transform_8(%arg0: i32) -> (i32, i32) {
    %c0_i32 = arith.constant 0 : i32
    %c0_i32_0 = arith.constant 0 : i32
    %c0_i32_1 = arith.constant 0 : i32
    return %c0_i32, %c0_i32_0 : i32, i32
  }
  func.func @transform_9(%arg0: i32) -> (i32, i32) {
    %c0_i32 = arith.constant 0 : i32
    %c0_i32_0 = arith.constant 0 : i32
    %c0_i32_1 = arith.constant 0 : i32
    return %c0_i32, %c0_i32_0 : i32, i32
  }
  func.func @transform_10(%arg0: i32) -> (i32, i32) {
    %c0_i32 = arith.constant 0 : i32
    %c0_i32_0 = arith.constant 0 : i32
    %c0_i32_1 = arith.constant 0 : i32
    return %c0_i32, %c0_i32_0 : i32, i32
  }
  func.func @transform_11(%arg0: i32) -> (i32, i32) {
    %c0_i32 = arith.constant 0 : i32
    %c0_i32_0 = arith.constant 0 : i32
    %c0_i32_1 = arith.constant 0 : i32
    return %c0_i32, %c0_i32_0 : i32, i32
  }
  func.func @transform_12(%arg0: i32) -> (i32, i32) {
    %c0_i32 = arith.constant 0 : i32
    %c0_i32_0 = arith.constant 0 : i32
    %c0_i32_1 = arith.constant 0 : i32
    return %c0_i32, %c0_i32_0 : i32, i32
  }
  func.func @transform_13(%arg0: i32) -> (i32, i32) {
    %c0_i32 = arith.constant 0 : i32
    %c0_i32_0 = arith.constant 0 : i32
    %c0_i32_1 = arith.constant 0 : i32
    return %c0_i32, %c0_i32_0 : i32, i32
  }
  func.func @transform_14(%arg0: i32) -> (i32, i32) {
    %c0_i32 = arith.constant 0 : i32
    %c0_i32_0 = arith.constant 0 : i32
    %c0_i32_1 = arith.constant 0 : i32
    return %c0_i32, %c0_i32_0 : i32, i32
  }
  func.func @transform_15(%arg0: i32) -> (i32, i32) {
    %c0_i32 = arith.constant 0 : i32
    %c0_i32_0 = arith.constant 0 : i32
    %c0_i32_1 = arith.constant 0 : i32
    return %c0_i32, %c0_i32_0 : i32, i32
  }
  func.func @transform_16(%arg0: i32) -> (i32, i32) {
    %c0_i32 = arith.constant 0 : i32
    %c0_i32_0 = arith.constant 0 : i32
    %c0_i32_1 = arith.constant 0 : i32
    return %c0_i32, %c0_i32_0 : i32, i32
  }
  func.func @transform_17(%arg0: i32) -> (i32, i32) {
    %c0_i32 = arith.constant 0 : i32
    %c0_i32_0 = arith.constant 0 : i32
    %c0_i32_1 = arith.constant 0 : i32
    return %c0_i32, %c0_i32_0 : i32, i32
  }
  func.func @transform_18(%arg0: i32) -> (i32, i32) {
    %c0_i32 = arith.constant 0 : i32
    %c0_i32_0 = arith.constant 0 : i32
    %c0_i32_1 = arith.constant 0 : i32
    return %c0_i32, %c0_i32_0 : i32, i32
  }
  func.func @transform_19(%arg0: i32) -> (i32, i32) {
    %c0_i32 = arith.constant 0 : i32
    %c0_i32_0 = arith.constant 0 : i32
    %c0_i32_1 = arith.constant 0 : i32
    return %c0_i32, %c0_i32_0 : i32, i32
  }
  func.func @transform_20(%arg0: i32) -> (i32, i32) {
    %c0_i32 = arith.constant 0 : i32
    %c0_i32_0 = arith.constant 0 : i32
    %c0_i32_1 = arith.constant 0 : i32
    return %c0_i32, %c0_i32_0 : i32, i32
  }
  func.func @transform_21(%arg0: i32) -> (i32, i32) {
    %c0_i32 = arith.constant 0 : i32
    %c0_i32_0 = arith.constant 0 : i32
    %c0_i32_1 = arith.constant 0 : i32
    return %c0_i32, %c0_i32_0 : i32, i32
  }
  func.func @transform_22(%arg0: i32) -> (i32, i32) {
    %c0_i32 = arith.constant 0 : i32
    %c0_i32_0 = arith.constant 0 : i32
    return %arg0, %c0_i32 : i32, i32
  }
}

</mosaic_0001>

<llo_original>
// kernel: lifting_net_forward.3
$region0: #{lifting_net_forward.3}
  #allocation0 [shape = 'u32[]', space=smem, size = 0x4, offset = 0x4, fixed_abs, tag = 'smem constant byte address 0x4 - core index']
  #allocation1 [shape = 'u32[144,128]{1,0:T(1,128)}', space=vmem, size = 0x12000, scoped, tag = 'internal scratch']
  %s0 = inlined_call_operand.vmem [shape: f32[64,125], index: 0, kind: input, shape index: {}]
  %s1 = inlined_call_operand.vmem [shape: f32[125,3], index: 1, kind: input, shape index: {}]
  %s2 = inlined_call_operand.vmem [shape: f32[1,3], index: 2, kind: input, shape index: {}]
  %s3 = inlined_call_operand.vmem [shape: f32[2,3], index: 3, kind: output, shape index: {}]
  %s4 = sld [smem:[#allocation0]]
  $region22: #{lifting_net_forward.3} parent=0
    _
  %s6 = ssub.s32 1, %s4
  %s7 = scalar_select 0, %s6, %s4
  // Predicated region
  $region2: #{lifting_net_forward.3} parent=0 // pred_check
    _
  $region3: #{lifting_net_forward.3} parent=0 // pred_check_branch
    %9 = sbr.rel (0) target = $region5
  $region4: #{lifting_net_forward.3} parent=0 // pred_region
    _
  $region5: #{lifting_net_forward.3} parent=0 // pred_fallthru
    _
  // Predicated region
  $region6: #{lifting_net_forward.3} parent=0 // pred_check
    _
  $region7: #{lifting_net_forward.3} parent=0 // pred_check_branch
    %11 = sbr.rel (0) target = $region9
  $region8: #{lifting_net_forward.3} parent=0 // pred_region
    _
  $region9: #{lifting_net_forward.3} parent=0 // pred_fallthru
    _
  // Predicated region
  $region10: #{lifting_net_forward.3} parent=0 // pred_check
    _
  $region11: #{lifting_net_forward.3} parent=0 // pred_check_branch
    %13 = sbr.rel (0) target = $region13
  $region12: #{lifting_net_forward.3} parent=0 // pred_region
    _
  $region13: #{lifting_net_forward.3} parent=0 // pred_fallthru
    _
  %v14 = vld [vmem:[%s1] sm:$0xff]
  %v15 = vld [vmem:[%s1 + $0x8] sm:$0xff]
  %v16 = vld [vmem:[%s1 + $0x10] sm:$0xff]
  %v17 = vld [vmem:[%s1 + $0x18] sm:$0xff]
  %v18 = vld [vmem:[%s1 + $0x20] sm:$0xff]
  %v19 = vld [vmem:[%s1 + $0x28] sm:$0xff]
  %v20 = vld [vmem:[%s1 + $0x30] sm:$0xff]
  %v21 = vld [vmem:[%s1 + $0x38] sm:$0xff]
  %v22 = vld [vmem:[%s1 + $0x40] sm:$0xff]
  %v23 = vld [vmem:[%s1 + $0x48] sm:$0xff]
  %v24 = vld [vmem:[%s1 + $0x50] sm:$0xff]
  %v25 = vld [vmem:[%s1 + $0x58] sm:$0xff]
  %v26 = vld [vmem:[%s1 + $0x60] sm:$0xff]
  %v27 = vld [vmem:[%s1 + $0x68] sm:$0xff]
  %v28 = vld [vmem:[%s1 + $0x70] sm:$0xff]
  %v29 = vld [vmem:[%s1 + $0x78] sm:$0x1f]
  %v30 = vld [vmem:[%s2] sm:$0x1]
  %v31 = vld [vmem:[%s0] sm:$0xff]
  %v32 = vld [vmem:[%s0 + $0x8] sm:$0xff]
  %v33 = vld [vmem:[%s0 + $0x10] sm:$0xff]
  %v34 = vld [vmem:[%s0 + $0x18] sm:$0xff]
  %vm35 = vcmask 1022976
  %v36 = vsel %vm35, %v31, -inf
  %v37 = vsel %vm35, %v32, -inf
  %v38 = vsel %vm35, %v33, -inf
  %v39 = vsel %vm35, %v34, -inf
  %v40 = vmax.f32 %v36, %v37
  %v41 = vmax.f32 %v38, %v39
  %v42 = vmax.f32 %v40, %v41
  %v43 = vrot.slane %v42, 4
  %v44 = vmax.f32 %v42, %v43
  %v45 = vrot.slane %v44, 2
  %v46 = vmax.f32 %v44, %v45
  %v47 = vrot.slane %v46, 1
  %v48 = vmax.f32 %v46, %v47
  %v50 = vsel %vm35, %v48, 0
  %vm52 = vcmask 1044480
  %v54 = vsel %vm52, %v29, 0
  %56 = vmatprep.subr.mxu0 0.0
  %57 = vmatpush1.msra.mxu0 %v14
  %58 = vmatprep.subr.mxu0 0.0
  %59 = vmatpush1.msra.mxu0 %v15
  %60 = vmatprep.subr.mxu0 0.0
  %61 = vmatpush1.msra.mxu0 %v16
  %62 = vmatprep.subr.mxu0 0.0
  %63 = vmatpush1.msra.mxu0 %v17
  %64 = vmatprep.subr.mxu0 0.0
  %65 = vmatpush1.msra.mxu0 %v18
  %66 = vmatprep.subr.mxu0 0.0
  %67 = vmatpush1.msra.mxu0 %v19
  %68 = vmatprep.subr.mxu0 0.0
  %69 = vmatpush1.msra.mxu0 %v20
  %70 = vmatprep.subr.mxu0 0.0
  %71 = vmatpush1.msra.mxu0 %v21
  %72 = vmatprep.subr.mxu0 0.0
  %73 = vmatpush1.msra.mxu0 %v22
  %74 = vmatprep.subr.mxu0 0.0
  %75 = vmatpush1.msra.mxu0 %v23
  %76 = vmatprep.subr.mxu0 0.0
  %77 = vmatpush1.msra.mxu0 %v24
  %78 = vmatprep.subr.mxu0 0.0
  %79 = vmatpush1.msra.mxu0 %v25
  %80 = vmatprep.subr.mxu0 0.0
  %81 = vmatpush1.msra.mxu0 %v26
  %82 = vmatprep.subr.mxu0 0.0
  %83 = vmatpush1.msra.mxu0 %v27
  %84 = vmatprep.subr.mxu0 0.0
  %85 = vmatpush1.msra.mxu0 %v28
  %86 = vmatprep.subr.mxu0 0.0
  %87 = vmatpush1.msra.mxu0 %v54
  %88 = vmatprep.subr.mxu0 0.0
  %89 = vmatpush1.msra.mxu0 0.0
  %90 = vmatprep.subr.mxu0 0.0
  %91 = vmatpush1.msra.mxu0 0.0
  %92 = vmatprep.subr.mxu0 0.0
  %93 = vmatpush1.msra.mxu0 0.0
  %94 = vmatprep.subr.mxu0 0.0
  %95 = vmatpush1.msra.mxu0 0.0
  %96 = vmatprep.subr.mxu0 0.0
  %97 = vmatpush1.msra.mxu0 0.0
  %98 = vmatprep.subr.mxu0 0.0
  %99 = vmatpush1.msra.mxu0 0.0
  %100 = vmatprep.subr.mxu0 0.0
  %101 = vmatpush1.msra.mxu0 0.0
  %102 = vmatprep.subr.mxu0 0.0
  %103 = vmatpush1.msra.mxu0 0.0
  %104 = vmatprep.subr.mxu0 0.0
  %105 = vmatpush1.msra.mxu0 0.0
  %106 = vmatprep.subr.mxu0 0.0
  %107 = vmatpush1.msra.mxu0 0.0
  %108 = vmatprep.subr.mxu0 0.0
  %109 = vmatpush1.msra.mxu0 0.0
  %110 = vmatprep.subr.mxu0 0.0
  %111 = vmatpush1.msra.mxu0 0.0
  %112 = vmatprep.subr.mxu0 0.0
  %113 = vmatpush1.msra.mxu0 0.0
  %114 = vmatprep.subr.mxu0 0.0
  %115 = vmatpush1.msra.mxu0 0.0
  %116 = vmatprep.subr.mxu0 0.0
  %117 = vmatpush1.msra.mxu0 0.0
  %118 = vmatprep.subr.mxu0 0.0
  %119 = vmatpush1.msra.mxu0 0.0
  %120 = vmatprep.mubr.f32.mxu0 0.0
  %121 = vmatmul.mubr.f32.gmra.mrb[0].mxu0 %v50
  %v122 = vpop.f32.mrb[0].mxu0
  %v123 = vadd.f32 %v30, %v122
  %v124 = vpop.f32.mrb[0].mxu0
  %125 = vdwg.mxu0
  %vm126 = vcmask 16384
  %127 = vst.msk [vmem:[%s3] sm:$0x1] %vm126, %v123
  %v128 = vld [vmem:[%s0 + $0x20] sm:$0xff]
  %v129 = vld [vmem:[%s0 + $0x28] sm:$0xff]
  %v130 = vld [vmem:[%s0 + $0x30] sm:$0xff]
  %v131 = vld [vmem:[%s0 + $0x38] sm:$0xff]
  %v132 = vsel %vm35, %v128, -inf
  %v133 = vsel %vm35, %v129, -inf
  %v134 = vsel %vm35, %v130, -inf
  %v135 = vsel %vm35, %v131, -inf
  %v136 = vmax.f32 %v132, %v133
  %v137 = vmax.f32 %v134, %v135
  %v138 = vmax.f32 %v136, %v137
  %v139 = vrot.slane %v138, 4
  %v140 = vmax.f32 %v138, %v139
  %v141 = vrot.slane %v140, 2
  %v142 = vmax.f32 %v140, %v141
  %v143 = vrot.slane %v142, 1
  %v144 = vmax.f32 %v142, %v143
  %v146 = vsel %vm35, %v144, 0
  %148 = vmatprep.subr.mxu0 0.0
  %149 = vmatpush1.msra.mxu0 %v14
  %150 = vmatprep.subr.mxu0 0.0
  %151 = vmatpush1.msra.mxu0 %v15
  %152 = vmatprep.subr.mxu0 0.0
  %153 = vmatpush1.msra.mxu0 %v16
  %154 = vmatprep.subr.mxu0 0.0
  %155 = vmatpush1.msra.mxu0 %v17
  %156 = vmatprep.subr.mxu0 0.0
  %157 = vmatpush1.msra.mxu0 %v18
  %158 = vmatprep.subr.mxu0 0.0
  %159 = vmatpush1.msra.mxu0 %v19
  %160 = vmatprep.subr.mxu0 0.0
  %161 = vmatpush1.msra.mxu0 %v20
  %162 = vmatprep.subr.mxu0 0.0
  %163 = vmatpush1.msra.mxu0 %v21
  %164 = vmatprep.subr.mxu0 0.0
  %165 = vmatpush1.msra.mxu0 %v22
  %166 = vmatprep.subr.mxu0 0.0
  %167 = vmatpush1.msra.mxu0 %v23
  %168 = vmatprep.subr.mxu0 0.0
  %169 = vmatpush1.msra.mxu0 %v24
  %170 = vmatprep.subr.mxu0 0.0
  %171 = vmatpush1.msra.mxu0 %v25
  %172 = vmatprep.subr.mxu0 0.0
  %173 = vmatpush1.msra.mxu0 %v26
  %174 = vmatprep.subr.mxu0 0.0
  %175 = vmatpush1.msra.mxu0 %v27
  %176 = vmatprep.subr.mxu0 0.0
  %177 = vmatpush1.msra.mxu0 %v28
  %178 = vmatprep.subr.mxu0 0.0
  %179 = vmatpush1.msra.mxu0 %v54
  %180 = vmatprep.subr.mxu0 0.0
  %181 = vmatpush1.msra.mxu0 0.0
  %182 = vmatprep.subr.mxu0 0.0
  %183 = vmatpush1.msra.mxu0 0.0
  %184 = vmatprep.subr.mxu0 0.0
  %185 = vmatpush1.msra.mxu0 0.0
  %186 = vmatprep.subr.mxu0 0.0
  %187 = vmatpush1.msra.mxu0 0.0
  %188 = vmatprep.subr.mxu0 0.0
  %189 = vmatpush1.msra.mxu0 0.0
  %190 = vmatprep.subr.mxu0 0.0
  %191 = vmatpush1.msra.mxu0 0.0
  %192 = vmatprep.subr.mxu0 0.0
  %193 = vmatpush1.msra.mxu0 0.0
  %194 = vmatprep.subr.mxu0 0.0
  %195 = vmatpush1.msra.mxu0 0.0
  %196 = vmatprep.subr.mxu0 0.0
  %197 = vmatpush1.msra.mxu0 0.0
  %198 = vmatprep.subr.mxu0 0.0
  %199 = vmatpush1.msra.mxu0 0.0
  %200 = vmatprep.subr.mxu0 0.0
  %201 = vmatpush1.msra.mxu0 0.0
  %202 = vmatprep.subr.mxu0 0.0
  %203 = vmatpush1.msra.mxu0 0.0
  %204 = vmatprep.subr.mxu0 0.0
  %205 = vmatpush1.msra.mxu0 0.0
  %206 = vmatprep.subr.mxu0 0.0
  %207 = vmatpush1.msra.mxu0 0.0
  %208 = vmatprep.subr.mxu0 0.0
  %209 = vmatpush1.msra.mxu0 0.0
  %210 = vmatprep.subr.mxu0 0.0
  %211 = vmatpush1.msra.mxu0 0.0
  %212 = vmatprep.mubr.f32.mxu0 0.0
  %213 = vmatmul.mubr.f32.gmra.mrb[0].mxu0 %v146
  %v214 = vpop.f32.mrb[0].mxu0
  %v215 = vadd.f32 %v30, %v214
  %v216 = vpop.f32.mrb[0].mxu0
  %217 = vdwg.mxu0
  %218 = vst.msk [vmem:[%s3 + $0x1] sm:$0x1] %vm126, %v215
  // Predicated region
  $region14: #{lifting_net_forward.3} parent=0 // pred_check
    _
  $region15: #{lifting_net_forward.3} parent=0 // pred_check_branch
    %220 = sbr.rel (0) target = $region17
  $region16: #{lifting_net_forward.3} parent=0 // pred_region
    _
  $region17: #{lifting_net_forward.3} parent=0 // pred_fallthru
    _
  // Predicated region
  $region18: #{lifting_net_forward.3} parent=0 // pred_check
    _
  $region19: #{lifting_net_forward.3} parent=0 // pred_check_branch
    %222 = sbr.rel (0) target = $region21
  $region20: #{lifting_net_forward.3} parent=0 // pred_region
    _
  $region21: #{lifting_net_forward.3} parent=0 // pred_fallthru
    _

// kernel: lifting_net_forward.2
$region0: #{lifting_net_forward.2}
  #allocation0 [shape = 'u32[]', space=smem, size = 0x4, offset = 0x4, fixed_abs, tag = 'smem constant byte address 0x4 - core index']
  #allocation1 [shape = 'u32[144,128]{1,0:T(1,128)}', space=vmem, size = 0x12000, scoped, tag = 'internal scratch']
  %s0 = inlined_call_operand.hbm [shape: f32[32,16], index: 0, kind: input, shape index: {}]
  %s1 = inlined_call_operand.hbm [shape: f32[16,40], index: 1, kind: input, shape index: {}]
  %s2 = inlined_call_operand.vmem [shape: f32[1,40], index: 2, kind: input, shape index: {}]
  %s3 = inlined_call_operand.hbm [shape: f32[1,40], index: 3, kind: input, shape index: {}]
  %s4 = inlined_call_operand.hbm [shape: f32[16,40], index: 4, kind: input, shape index: {}]
  %s5 = inlined_call_operand.hbm [shape: f32[40,40], index: 5, kind: input, shape index: {}]
  %s6 = inlined_call_operand.hbm [shape: f32[1,40], index: 6, kind: input, shape index: {}]
  %s7 = inlined_call_operand.hbm [shape: f32[1,40], index: 7, kind: input, shape index: {}]
  %s8 = inlined_call_operand.vmem [shape: f32[40,100], index: 8, kind: input, shape index: {}]
  %s9 = inlined_call_operand.hbm [shape: f32[1,100], index: 9, kind: input, shape index: {}]
  %s10 = inlined_call_operand.vmem [shape: f32[1,100], index: 10, kind: input, shape index: {}]
  %s11 = inlined_call_operand.hbm [shape: f32[40,100], index: 11, kind: input, shape index: {}]
  %s12 = inlined_call_operand.hbm [shape: f32[100,100], index: 12, kind: input, shape index: {}]
  %s13 = inlined_call_operand.vmem [shape: f32[1,100], index: 13, kind: input, shape index: {}]
  %s14 = inlined_call_operand.vmem [shape: f32[1,100], index: 14, kind: input, shape index: {}]
  %s15 = inlined_call_operand.hbm [shape: f32[100,250], index: 15, kind: input, shape index: {}]
  %s16 = inlined_call_operand.vmem [shape: f32[1,250], index: 16, kind: input, shape index: {}]
  %s17 = inlined_call_operand.vmem [shape: f32[1,250], index: 17, kind: input, shape index: {}]
  %s18 = inlined_call_operand.hbm [shape: f32[100,250], index: 18, kind: input, shape index: {}]
  %s19 = inlined_call_operand.hbm [shape: f32[250,250], index: 19, kind: input, shape index: {}]
  %s20 = inlined_call_operand.vmem [shape: f32[1,250], index: 20, kind: input, shape index: {}]
  %s21 = inlined_call_operand.vmem [shape: f32[1,250], index: 21, kind: input, shape index: {}]
  %s22 = inlined_call_operand.vmem [shape: f32[32,250], index: 22, kind: output, shape index: {}]
  %s23 = sld [smem:[#allocation0]]
  $region173: #{lifting_net_forward.2} parent=0
    _
  %s25 = ssub.s32 1, %s23
  %s26 = scalar_select 0, %s25, %s23
  $region1: #{lifting_net_forward.2} parent=0
    #allocation2 [shape = 'u8[16384]{0}', space=vmem, size = 0x4000, scoped, tag = 'input window, operand 0']
    #allocation3 [shape = 's32[2]{0}', space=sflag, size = 0x8, scoped, tag = 'scoped memory for lifting_net_forward.2']
    #allocation4 [shape = 'u8[8192]{0}', space=vmem, size = 0x2000, scoped, tag = 'input window, operand 1, single buffered']
    #allocation5 [shape = 's32[1]{0}', space=sflag, size = 0x4, scoped, tag = 'scoped memory for lifting_net_forward.2']
    #allocation6 [shape = 'u8[512]{0}', space=vmem, size = 0x400, scoped, tag = 'input window, operand 3, single buffered']
    #allocation7 [shape = 'u8[8192]{0}', space=vmem, size = 0x2000, scoped, tag = 'input window, operand 4, single buffered']
    #allocation8 [shape = 's32[1]{0}', space=sflag, size = 0x4, scoped, tag = 'scoped memory for lifting_net_forward.2']
    #allocation9 [shape = 'u8[20480]{0}', space=vmem, size = 0x5000, scoped, tag = 'input window, operand 5, single buffered']
    #allocation10 [shape = 'u8[512]{0}', space=vmem, size = 0x400, scoped, tag = 'input window, operand 6, single buffered']
    #allocation11 [shape = 's32[1]{0}', space=sflag, size = 0x4, scoped, tag = 'scoped memory for lifting_net_forward.2']
    #allocation12 [shape = 'u8[512]{0}', space=vmem, size = 0x400, scoped, tag = 'input window, operand 7, single buffered']
    #allocation13 [shape = 'u8[512]{0}', space=vmem, size = 0x400, scoped, tag = 'input window, operand 9, single buffered']
    #allocation14 [shape = 's32[1]{0}', space=sflag, size = 0x4, scoped, tag = 'scoped memory for lifting_net_forward.2']
    #allocation15 [shape = 'u8[20480]{0}', space=vmem, size = 0x5000, scoped, tag = 'input window, operand 11, single buffered']
    #allocation16 [shape = 'u8[53248]{0}', space=vmem, size = 0xd000, scoped, tag = 'input window, operand 12, single buffered']
    #allocation17 [shape = 's32[1]{0}', space=sflag, size = 0x4, scoped, tag = 'scoped memory for lifting_net_forward.2']
    #allocation18 [shape = 'u8[106496]{0}', space=vmem, size = 0x1a000, scoped, tag = 'input window, operand 15, single buffered']
    #allocation19 [shape = 'u8[106496]{0}', space=vmem, size = 0x1a000, scoped, tag = 'input window, operand 18, single buffered']
    #allocation20 [shape = 's32[1]{0}', space=sflag, size = 0x4, scoped, tag = 'scoped memory for lifting_net_forward.2']
    #allocation21 [shape = 'u8[262144]{0}', space=vmem, size = 0x40000, scoped, tag = 'input window, operand 19, single buffered']
    %27 = vsyncpa [#allocation3], 0
    %s28 = scalar_lea.sflag [#allocation3], 1
    %29 = vsyncpa %s28, 0
    %30 = vsyncpa [#allocation5], 0
    %31 = vsyncpa [#allocation8], 0
    %32 = vsyncpa [#allocation11], 0
    %33 = vsyncpa [#allocation14], 0
    %34 = vsyncpa [#allocation17], 0
    %35 = vsyncpa [#allocation20], 0
    loop: start=0, step=1, limit=4
    $region2: #{lifting_net_forward.2} parent=1 // loop_pre_header
      _
    $region3: #{lifting_net_forward.2} parent=1 // loop_header
      %s37 = sphi 0, %s41
      %p38 = scmp.ge.s32.totalorder %s37, 4
      %s47 = sphi 0, %s49
      %s50 = sphi 0, %s47
      %s51 = sphi 0, %s50
      %s67 = sphi 0, %s51
      %s71 = sphi 0, %s71
      %s73 = sphi 0, %s71
      %s74 = sphi 0, %s73
      %s88 = sphi 0, %s74
      %s92 = sphi 0, %s92
      %s94 = sphi 0, %s92
      %s95 = sphi 0, %s94
      %s109 = sphi 0, %s95
      %s113 = sphi 0, %s113
      %s115 = sphi 0, %s113
      %s116 = sphi 0, %s115
      %s130 = sphi 0, %s116
      %s134 = sphi 0, %s134
      %s136 = sphi 0, %s134
      %s137 = sphi 0, %s136
      %s151 = sphi 0, %s137
      %s155 = sphi 0, %s155
      %s157 = sphi 0, %s155
      %s158 = sphi 0, %s157
      %s172 = sphi 0, %s158
      %s176 = sphi 0, %s176
      %s178 = sphi 0, %s176
      %s179 = sphi 0, %s178
      %s193 = sphi 0, %s179
      %s197 = sphi 0, %s197
      %s199 = sphi 0, %s197
      %s200 = sphi 0, %s199
      %s214 = sphi 0, %s200
      %s218 = sphi 0, %s218
      %s220 = sphi 0, %s218
      %s221 = sphi 0, %s220
      %s235 = sphi 0, %s221
      %s239 = sphi 0, %s239
      %s241 = sphi 0, %s239
      %s242 = sphi 0, %s241
      %s256 = sphi 0, %s242
      %s260 = sphi 0, %s260
      %s262 = sphi 0, %s260
      %s263 = sphi 0, %s262
      %s277 = sphi 0, %s263
      %s281 = sphi 0, %s281
      %s283 = sphi 0, %s281
      %s284 = sphi 0, %s283
      %s298 = sphi 0, %s284
      %s302 = sphi 0, %s302
      %s304 = sphi 0, %s302
      %s305 = sphi 0, %s304
      %s319 = sphi 0, %s305
      %s323 = sphi 0, %s323
      %s325 = sphi 0, %s323
      %s326 = sphi 0, %s325
      %s340 = sphi 0, %s326
      %s344 = sphi 0, %s344
      %s346 = sphi 0, %s344
      %s347 = sphi 0, %s346
      %s361 = sphi 0, %s347
      %s365 = sphi 0, %s365
      %s367 = sphi 0, %s365
      %s368 = sphi 0, %s367
      %s382 = sphi 0, %s368
      %s386 = sphi 0, %s386
      %s388 = sphi 0, %s386
      %s389 = sphi 0, %s388
      %s403 = sphi 0, %s389
      %s407 = sphi 0, %s407
      %s409 = sphi 0, %s407
      %s410 = sphi 0, %s409
      %s424 = sphi 0, %s410
      %s428 = sphi 0, %s428
      %s430 = sphi 0, %s428
      %s431 = sphi 0, %s430
      %s445 = sphi 0, %s431
      %s449 = sphi 0, %s449
      %s451 = sphi 0, %s449
      %s452 = sphi 0, %s451
      %s466 = sphi 0, %s452
      %s470 = sphi 0, %s470
      %s472 = sphi 0, %s470
      %s473 = sphi 0, %s472
      %s487 = sphi 0, %s473
      %s491 = sphi 0, %s491
      %s493 = sphi 0, %s491
      %s494 = sphi 0, %s493
      %s508 = sphi 0, %s494
      %s514 = sphi 0, %s516
      %s517 = sphi 0, %s514
      %s518 = sphi 0, %s517
      %s534 = sphi 0, %s518
    $region4: #{lifting_net_forward.2} parent=1 // loop_header_branch
      %40 = sbr.rel (%p38) target = $region8
    $region5: #{lifting_net_forward.2} parent=1 // loop_body
      %s42 = ssub.s32 %s37, 1
      %s43 = ssub.s32 %s37, 2
      %s44 = sadd.s32 %s37, 1
      %s45 = ssub.s32 %s37, %s44
      %p46 = scmp.eq.s32.totalorder %s45, 0
      %s48 = sadd.s32 %s47, 1
      %s49 = scalar_select %p46, %s47, %s48
      %p52 = pneg %p46
      %p53 = scmp.eq.s32.totalorder %s37, 1
      %p54 = por %p52, %p53
      %p55 = scmp.ne.s32.totalorder %s47, %s50
      %p56 = scmp.eq.s32.totalorder %s37, 0
      %p57 = por %p55, %p56
      %p58 = scmp.ne.s32.totalorder %s47, %s50
      %p59 = scmp.eq.s32.totalorder %s42, 1
      %p60 = por %p58, %p59
      %p61 = scmp.ne.s32.totalorder %s50, %s51
      %p62 = scmp.eq.s32.totalorder %s42, 0
      %p63 = por %p61, %p62
      %p64 = scmp.ne.s32.totalorder %s50, %s51
      %p65 = scmp.eq.s32.totalorder %s43, 1
      %p66 = por %p64, %p65
      %p68 = scmp.ne.s32.totalorder %s51, %s67
      %p69 = scmp.eq.s32.totalorder %s43, 0
      %p70 = por %p68, %p69
      %s72 = sadd.s32 %s71, 1
      %p75 = scmp.eq.s32.totalorder %s37, 1
      %p76 = scmp.ne.s32.totalorder %s71, %s73
      %p77 = scmp.eq.s32.totalorder %s37, 0
      %p78 = por %p76, %p77
      %p79 = scmp.ne.s32.totalorder %s71, %s73
      %p80 = scmp.eq.s32.totalorder %s42, 1
      %p81 = por %p79, %p80
      %p82 = scmp.ne.s32.totalorder %s73, %s74
      %p83 = scmp.eq.s32.totalorder %s42, 0
      %p84 = por %p82, %p83
      %p85 = scmp.ne.s32.totalorder %s73, %s74
      %p86 = scmp.eq.s32.totalorder %s43, 1
      %p87 = por %p85, %p86
      %p89 = scmp.ne.s32.totalorder %s74, %s88
      %p90 = scmp.eq.s32.totalorder %s43, 0
      %p91 = por %p89, %p90
      %s93 = sadd.s32 %s92, 1
      %p96 = scmp.eq.s32.totalorder %s37, 1
      %p97 = scmp.ne.s32.totalorder %s92, %s94
      %p98 = scmp.eq.s32.totalorder %s37, 0
      %p99 = por %p97, %p98
      %p100 = scmp.ne.s32.totalorder %s92, %s94
      %p101 = scmp.eq.s32.totalorder %s42, 1
      %p102 = por %p100, %p101
      %p103 = scmp.ne.s32.totalorder %s94, %s95
      %p104 = scmp.eq.s32.totalorder %s42, 0
      %p105 = por %p103, %p104
      %p106 = scmp.ne.s32.totalorder %s94, %s95
      %p107 = scmp.eq.s32.totalorder %s43, 1
      %p108 = por %p106, %p107
      %p110 = scmp.ne.s32.totalorder %s95, %s109
      %p111 = scmp.eq.s32.totalorder %s43, 0
      %p112 = por %p110, %p111
      %s114 = sadd.s32 %s113, 1
      %p117 = scmp.eq.s32.totalorder %s37, 1
      %p118 = scmp.ne.s32.totalorder %s113, %s115
      %p119 = scmp.eq.s32.totalorder %s37, 0
      %p120 = por %p118, %p119
      %p121 = scmp.ne.s32.totalorder %s113, %s115
      %p122 = scmp.eq.s32.totalorder %s42, 1
      %p123 = por %p121, %p122
      %p124 = scmp.ne.s32.totalorder %s115, %s116
      %p125 = scmp.eq.s32.totalorder %s42, 0
      %p126 = por %p124, %p125
      %p127 = scmp.ne.s32.totalorder %s115, %s116
      %p128 = scmp.eq.s32.totalorder %s43, 1
      %p129 = por %p127, %p128
      %p131 = scmp.ne.s32.totalorder %s116, %s130
      %p132 = scmp.eq.s32.totalorder %s43, 0
      %p133 = por %p131, %p132
      %s135 = sadd.s32 %s134, 1
      %p138 = scmp.eq.s32.totalorder %s37, 1
      %p139 = scmp.ne.s32.totalorder %s134, %s136
      %p140 = scmp.eq.s32.totalorder %s37, 0
      %p141 = por %p139, %p140
      %p142 = scmp.ne.s32.totalorder %s134, %s136
      %p143 = scmp.eq.s32.totalorder %s42, 1
      %p144 = por %p142, %p143
      %p145 = scmp.ne.s32.totalorder %s136, %s137
      %p146 = scmp.eq.s32.totalorder %s42, 0
      %p147 = por %p145, %p146
      %p148 = scmp.ne.s32.totalorder %s136, %s137
      %p149 = scmp.eq.s32.totalorder %s43, 1
      %p150 = por %p148, %p149
      %p152 = scmp.ne.s32.totalorder %s137, %s151
      %p153 = scmp.eq.s32.totalorder %s43, 0
      %p154 = por %p152, %p153
      %s156 = sadd.s32 %s155, 1
      %p159 = scmp.eq.s32.totalorder %s37, 1
      %p160 = scmp.ne.s32.totalorder %s155, %s157
      %p161 = scmp.eq.s32.totalorder %s37, 0
      %p162 = por %p160, %p161
      %p163 = scmp.ne.s32.totalorder %s155, %s157
      %p164 = scmp.eq.s32.totalorder %s42, 1
      %p165 = por %p163, %p164
      %p166 = scmp.ne.s32.totalorder %s157, %s158
      %p167 = scmp.eq.s32.totalorder %s42, 0
      %p168 = por %p166, %p167
      %p169 = scmp.ne.s32.totalorder %s157, %s158
      %p170 = scmp.eq.s32.totalorder %s43, 1
      %p171 = por %p169, %p170
      %p173 = scmp.ne.s32.totalorder %s158, %s172
      %p174 = scmp.eq.s32.totalorder %s43, 0
      %p175 = por %p173, %p174
      %s177 = sadd.s32 %s176, 1
      %p180 = scmp.eq.s32.totalorder %s37, 1
      %p181 = scmp.ne.s32.totalorder %s176, %s178
      %p182 = scmp.eq.s32.totalorder %s37, 0
      %p183 = por %p181, %p182
      %p184 = scmp.ne.s32.totalorder %s176, %s178
      %p185 = scmp.eq.s32.totalorder %s42, 1
      %p186 = por %p184, %p185
      %p187 = scmp.ne.s32.totalorder %s178, %s179
      %p188 = scmp.eq.s32.totalorder %s42, 0
      %p189 = por %p187, %p188
      %p190 = scmp.ne.s32.totalorder %s178, %s179
      %p191 = scmp.eq.s32.totalorder %s43, 1
      %p192 = por %p190, %p191
      %p194 = scmp.ne.s32.totalorder %s179, %s193
      %p195 = scmp.eq.s32.totalorder %s43, 0
      %p196 = por %p194, %p195
      %s198 = sadd.s32 %s197, 1
      %p201 = scmp.eq.s32.totalorder %s37, 1
      %p202 = scmp.ne.s32.totalorder %s197, %s199
      %p203 = scmp.eq.s32.totalorder %s37, 0
      %p204 = por %p202, %p203
      %p205 = scmp.ne.s32.totalorder %s197, %s199
      %p206 = scmp.eq.s32.totalorder %s42, 1
      %p207 = por %p205, %p206
      %p208 = scmp.ne.s32.totalorder %s199, %s200
      %p209 = scmp.eq.s32.totalorder %s42, 0
      %p210 = por %p208, %p209
      %p211 = scmp.ne.s32.totalorder %s199, %s200
      %p212 = scmp.eq.s32.totalorder %s43, 1
      %p213 = por %p211, %p212
      %p215 = scmp.ne.s32.totalorder %s200, %s214
      %p216 = scmp.eq.s32.totalorder %s43, 0
      %p217 = por %p215, %p216
      %s219 = sadd.s32 %s218, 1
      %p222 = scmp.eq.s32.totalorder %s37, 1
      %p223 = scmp.ne.s32.totalorder %s218, %s220
      %p224 = scmp.eq.s32.totalorder %s37, 0
      %p225 = por %p223, %p224
      %p226 = scmp.ne.s32.totalorder %s218, %s220
      %p227 = scmp.eq.s32.totalorder %s42, 1
      %p228 = por %p226, %p227
      %p229 = scmp.ne.s32.totalorder %s220, %s221
      %p230 = scmp.eq.s32.totalorder %s42, 0
      %p231 = por %p229, %p230
      %p232 = scmp.ne.s32.totalorder %s220, %s221
      %p233 = scmp.eq.s32.totalorder %s43, 1
      %p234 = por %p232, %p233
      %p236 = scmp.ne.s32.totalorder %s221, %s235
      %p237 = scmp.eq.s32.totalorder %s43, 0
      %p238 = por %p236, %p237
      %s240 = sadd.s32 %s239, 1
      %p243 = scmp.eq.s32.totalorder %s37, 1
      %p244 = scmp.ne.s32.totalorder %s239, %s241
      %p245 = scmp.eq.s32.totalorder %s37, 0
      %p246 = por %p244, %p245
      %p247 = scmp.ne.s32.totalorder %s239, %s241
      %p248 = scmp.eq.s32.totalorder %s42, 1
      %p249 = por %p247, %p248
      %p250 = scmp.ne.s32.totalorder %s241, %s242
      %p251 = scmp.eq.s32.totalorder %s42, 0
      %p252 = por %p250, %p251
      %p253 = scmp.ne.s32.totalorder %s241, %s242
      %p254 = scmp.eq.s32.totalorder %s43, 1
      %p255 = por %p253, %p254
      %p257 = scmp.ne.s32.totalorder %s242, %s256
      %p258 = scmp.eq.s32.totalorder %s43, 0
      %p259 = por %p257, %p258
      %s261 = sadd.s32 %s260, 1
      %p264 = scmp.eq.s32.totalorder %s37, 1
      %p265 = scmp.ne.s32.totalorder %s260, %s262
      %p266 = scmp.eq.s32.totalorder %s37, 0
      %p267 = por %p265, %p266
      %p268 = scmp.ne.s32.totalorder %s260, %s262
      %p269 = scmp.eq.s32.totalorder %s42, 1
      %p270 = por %p268, %p269
      %p271 = scmp.ne.s32.totalorder %s262, %s263
      %p272 = scmp.eq.s32.totalorder %s42, 0
      %p273 = por %p271, %p272
      %p274 = scmp.ne.s32.totalorder %s262, %s263
      %p275 = scmp.eq.s32.totalorder %s43, 1
      %p276 = por %p274, %p275
      %p278 = scmp.ne.s32.totalorder %s263, %s277
      %p279 = scmp.eq.s32.totalorder %s43, 0
      %p280 = por %p278, %p279
      %s282 = sadd.s32 %s281, 1
      %p285 = scmp.eq.s32.totalorder %s37, 1
      %p286 = scmp.ne.s32.totalorder %s281, %s283
      %p287 = scmp.eq.s32.totalorder %s37, 0
      %p288 = por %p286, %p287
      %p289 = scmp.ne.s32.totalorder %s281, %s283
      %p290 = scmp.eq.s32.totalorder %s42, 1
      %p291 = por %p289, %p290
      %p292 = scmp.ne.s32.totalorder %s283, %s284
      %p293 = scmp.eq.s32.totalorder %s42, 0
      %p294 = por %p292, %p293
      %p295 = scmp.ne.s32.totalorder %s283, %s284
      %p296 = scmp.eq.s32.totalorder %s43, 1
      %p297 = por %p295, %p296
      %p299 = scmp.ne.s32.totalorder %s284, %s298
      %p300 = scmp.eq.s32.totalorder %s43, 0
      %p301 = por %p299, %p300
      %s303 = sadd.s32 %s302, 1
      %p306 = scmp.eq.s32.totalorder %s37, 1
      %p307 = scmp.ne.s32.totalorder %s302, %s304
      %p308 = scmp.eq.s32.totalorder %s37, 0
      %p309 = por %p307, %p308
      %p310 = scmp.ne.s32.totalorder %s302, %s304
      %p311 = scmp.eq.s32.totalorder %s42, 1
      %p312 = por %p310, %p311
      %p313 = scmp.ne.s32.totalorder %s304, %s305
      %p314 = scmp.eq.s32.totalorder %s42, 0
      %p315 = por %p313, %p314
      %p316 = scmp.ne.s32.totalorder %s304, %s305
      %p317 = scmp.eq.s32.totalorder %s43, 1
      %p318 = por %p316, %p317
      %p320 = scmp.ne.s32.totalorder %s305, %s319
      %p321 = scmp.eq.s32.totalorder %s43, 0
      %p322 = por %p320, %p321
      %s324 = sadd.s32 %s323, 1
      %p327 = scmp.eq.s32.totalorder %s37, 1
      %p328 = scmp.ne.s32.totalorder %s323, %s325
      %p329 = scmp.eq.s32.totalorder %s37, 0
      %p330 = por %p328, %p329
      %p331 = scmp.ne.s32.totalorder %s323, %s325
      %p332 = scmp.eq.s32.totalorder %s42, 1
      %p333 = por %p331, %p332
      %p334 = scmp.ne.s32.totalorder %s325, %s326
      %p335 = scmp.eq.s32.totalorder %s42, 0
      %p336 = por %p334, %p335
      %p337 = scmp.ne.s32.totalorder %s325, %s326
      %p338 = scmp.eq.s32.totalorder %s43, 1
      %p339 = por %p337, %p338
      %p341 = scmp.ne.s32.totalorder %s326, %s340
      %p342 = scmp.eq.s32.totalorder %s43, 0
      %p343 = por %p341, %p342
      %s345 = sadd.s32 %s344, 1
      %p348 = scmp.eq.s32.totalorder %s37, 1
      %p349 = scmp.ne.s32.totalorder %s344, %s346
      %p350 = scmp.eq.s32.totalorder %s37, 0
      %p351 = por %p349, %p350
      %p352 = scmp.ne.s32.totalorder %s344, %s346
      %p353 = scmp.eq.s32.totalorder %s42, 1
      %p354 = por %p352, %p353
      %p355 = scmp.ne.s32.totalorder %s346, %s347
      %p356 = scmp.eq.s32.totalorder %s42, 0
      %p357 = por %p355, %p356
      %p358 = scmp.ne.s32.totalorder %s346, %s347
      %p359 = scmp.eq.s32.totalorder %s43, 1
      %p360 = por %p358, %p359
      %p362 = scmp.ne.s32.totalorder %s347, %s361
      %p363 = scmp.eq.s32.totalorder %s43, 0
      %p364 = por %p362, %p363
      %s366 = sadd.s32 %s365, 1
      %p369 = scmp.eq.s32.totalorder %s37, 1
      %p370 = scmp.ne.s32.totalorder %s365, %s367
      %p371 = scmp.eq.s32.totalorder %s37, 0
      %p372 = por %p370, %p371
      %p373 = scmp.ne.s32.totalorder %s365, %s367
      %p374 = scmp.eq.s32.totalorder %s42, 1
      %p375 = por %p373, %p374
      %p376 = scmp.ne.s32.totalorder %s367, %s368
      %p377 = scmp.eq.s32.totalorder %s42, 0
      %p378 = por %p376, %p377
      %p379 = scmp.ne.s32.totalorder %s367, %s368
      %p380 = scmp.eq.s32.totalorder %s43, 1
      %p381 = por %p379, %p380
      %p383 = scmp.ne.s32.totalorder %s368, %s382
      %p384 = scmp.eq.s32.totalorder %s43, 0
      %p385 = por %p383, %p384
      %s387 = sadd.s32 %s386, 1
      %p390 = scmp.eq.s32.totalorder %s37, 1
      %p391 = scmp.ne.s32.totalorder %s386, %s388
      %p392 = scmp.eq.s32.totalorder %s37, 0
      %p393 = por %p391, %p392
      %p394 = scmp.ne.s32.totalorder %s386, %s388
      %p395 = scmp.eq.s32.totalorder %s42, 1
      %p396 = por %p394, %p395
      %p397 = scmp.ne.s32.totalorder %s388, %s389
      %p398 = scmp.eq.s32.totalorder %s42, 0
      %p399 = por %p397, %p398
      %p400 = scmp.ne.s32.totalorder %s388, %s389
      %p401 = scmp.eq.s32.totalorder %s43, 1
      %p402 = por %p400, %p401
      %p404 = scmp.ne.s32.totalorder %s389, %s403
      %p405 = scmp.eq.s32.totalorder %s43, 0
      %p406 = por %p404, %p405
      %s408 = sadd.s32 %s407, 1
      %p411 = scmp.eq.s32.totalorder %s37, 1
      %p412 = scmp.ne.s32.totalorder %s407, %s409
      %p413 = scmp.eq.s32.totalorder %s37, 0
      %p414 = por %p412, %p413
      %p415 = scmp.ne.s32.totalorder %s407, %s409
      %p416 = scmp.eq.s32.totalorder %s42, 1
      %p417 = por %p415, %p416
      %p418 = scmp.ne.s32.totalorder %s409, %s410
      %p419 = scmp.eq.s32.totalorder %s42, 0
      %p420 = por %p418, %p419
      %p421 = scmp.ne.s32.totalorder %s409, %s410
      %p422 = scmp.eq.s32.totalorder %s43, 1
      %p423 = por %p421, %p422
      %p425 = scmp.ne.s32.totalorder %s410, %s424
      %p426 = scmp.eq.s32.totalorder %s43, 0
      %p427 = por %p425, %p426
      %s429 = sadd.s32 %s428, 1
      %p432 = scmp.eq.s32.totalorder %s37, 1
      %p433 = scmp.ne.s32.totalorder %s428, %s430
      %p434 = scmp.eq.s32.totalorder %s37, 0
      %p435 = por %p433, %p434
      %p436 = scmp.ne.s32.totalorder %s428, %s430
      %p437 = scmp.eq.s32.totalorder %s42, 1
      %p438 = por %p436, %p437
      %p439 = scmp.ne.s32.totalorder %s430, %s431
      %p440 = scmp.eq.s32.totalorder %s42, 0
      %p441 = por %p439, %p440
      %p442 = scmp.ne.s32.totalorder %s430, %s431
      %p443 = scmp.eq.s32.totalorder %s43, 1
      %p444 = por %p442, %p443
      %p446 = scmp.ne.s32.totalorder %s431, %s445
      %p447 = scmp.eq.s32.totalorder %s43, 0
      %p448 = por %p446, %p447
      %s450 = sadd.s32 %s449, 1
      %p453 = scmp.eq.s32.totalorder %s37, 1
      %p454 = scmp.ne.s32.totalorder %s449, %s451
      %p455 = scmp.eq.s32.totalorder %s37, 0
      %p456 = por %p454, %p455
      %p457 = scmp.ne.s32.totalorder %s449, %s451
      %p458 = scmp.eq.s32.totalorder %s42, 1
      %p459 = por %p457, %p458
      %p460 = scmp.ne.s32.totalorder %s451, %s452
      %p461 = scmp.eq.s32.totalorder %s42, 0
      %p462 = por %p460, %p461
      %p463 = scmp.ne.s32.totalorder %s451, %s452
      %p464 = scmp.eq.s32.totalorder %s43, 1
      %p465 = por %p463, %p464
      %p467 = scmp.ne.s32.totalorder %s452, %s466
      %p468 = scmp.eq.s32.totalorder %s43, 0
      %p469 = por %p467, %p468
      %s471 = sadd.s32 %s470, 1
      %p474 = scmp.eq.s32.totalorder %s37, 1
      %p475 = scmp.ne.s32.totalorder %s470, %s472
      %p476 = scmp.eq.s32.totalorder %s37, 0
      %p477 = por %p475, %p476
      %p478 = scmp.ne.s32.totalorder %s470, %s472
      %p479 = scmp.eq.s32.totalorder %s42, 1
      %p480 = por %p478, %p479
      %p481 = scmp.ne.s32.totalorder %s472, %s473
      %p482 = scmp.eq.s32.totalorder %s42, 0
      %p483 = por %p481, %p482
      %p484 = scmp.ne.s32.totalorder %s472, %s473
      %p485 = scmp.eq.s32.totalorder %s43, 1
      %p486 = por %p484, %p485
      %p488 = scmp.ne.s32.totalorder %s473, %s487
      %p489 = scmp.eq.s32.totalorder %s43, 0
      %p490 = por %p488, %p489
      %s492 = sadd.s32 %s491, 1
      %p495 = scmp.eq.s32.totalorder %s37, 1
      %p496 = scmp.ne.s32.totalorder %s491, %s493
      %p497 = scmp.eq.s32.totalorder %s37, 0
      %p498 = por %p496, %p497
      %p499 = scmp.ne.s32.totalorder %s491, %s493
      %p500 = scmp.eq.s32.totalorder %s42, 1
      %p501 = por %p499, %p500
      %p502 = scmp.ne.s32.totalorder %s493, %s494
      %p503 = scmp.eq.s32.totalorder %s42, 0
      %p504 = por %p502, %p503
      %p505 = scmp.ne.s32.totalorder %s493, %s494
      %p506 = scmp.eq.s32.totalorder %s43, 1
      %p507 = por %p505, %p506
      %p509 = scmp.ne.s32.totalorder %s494, %s508
      %p510 = scmp.eq.s32.totalorder %s43, 0
      %p511 = por %p509, %p510
      %s512 = ssub.s32 %s37, %s44
      %p513 = scmp.eq.s32.totalorder %s512, 0
      %s515 = sadd.s32 %s514, 1
      %s516 = scalar_select %p513, %s514, %s515
      %p519 = pneg %p513
      %p520 = scmp.eq.s32.totalorder %s37, 1
      %p521 = por %p519, %p520
      %p522 = scmp.ne.s32.totalorder %s514, %s517
      %p523 = scmp.eq.s32.totalorder %s37, 0
      %p524 = por %p522, %p523
      %p525 = scmp.ne.s32.totalorder %s514, %s517
      %p526 = scmp.eq.s32.totalorder %s42, 1
      %p527 = por %p525, %p526
      %p528 = scmp.ne.s32.totalorder %s517, %s518
      %p529 = scmp.eq.s32.totalorder %s42, 0
      %p530 = por %p528, %p529
      %p531 = scmp.ne.s32.totalorder %s517, %s518
      %p532 = scmp.eq.s32.totalorder %s43, 1
      %p533 = por %p531, %p532
      %p535 = scmp.ne.s32.totalorder %s518, %s534
      %p536 = scmp.eq.s32.totalorder %s43, 0
      %p537 = por %p535, %p536
      %p538 = scmp.le.s32.totalorder 1, %s37
      %p539 = scmp.lt.s32.totalorder %s37, 3
      %p540 = pnand %p538, %p539
      %p541 = pneg %p540
      // Predicated region
      $region9: #{lifting_net_forward.2} parent=5 // pred_check
        _
      $region10: #{lifting_net_forward.2} parent=5 // pred_check_branch
        %543 = sbr.rel (%p540) target = $region12
      $region11: #{lifting_net_forward.2} parent=5 // pred_region
        %s544 = ssub.s32 %s37, 1
        // Predicated region
        $region13: #{lifting_net_forward.2} parent=11 // pred_check
          %p545 = pneg %p84
        $region14: #{lifting_net_forward.2} parent=11 // pred_check_branch
          %547 = sbr.rel (%p545) target = $region16
        $region15: #{lifting_net_forward.2} parent=11 // pred_region
          %s549 = ssub.s32 256, 256
          %550 = vsyncadd [#allocation5], %s549
          %s551 = sshll.u32 [#allocation4], 4
          %s552 = int_to_ptr.vmem [resolvable:$true] %s551
          %557 = dma.hbm_to_vmem [thread:$0]  %s1, 256, %s552, [#allocation5], 128, 128, 8
        $region16: #{lifting_net_forward.2} parent=11 // pred_fallthru
          _
        // Predicated region
        $region17: #{lifting_net_forward.2} parent=11 // pred_check
          %p558 = pneg %p105
        $region18: #{lifting_net_forward.2} parent=11 // pred_check_branch
          %560 = sbr.rel (%p558) target = $region20
        $region19: #{lifting_net_forward.2} parent=11 // pred_region
          _
        $region20: #{lifting_net_forward.2} parent=11 // pred_fallthru
          _
        // Predicated region
        $region21: #{lifting_net_forward.2} parent=11 // pred_check
          %p561 = pneg %p126
        $region22: #{lifting_net_forward.2} parent=11 // pred_check_branch
          %563 = sbr.rel (%p561) target = $region24
        $region23: #{lifting_net_forward.2} parent=11 // pred_region
          %s565 = ssub.s32 16, 16
          %566 = vsyncadd [#allocation5], %s565
          %s568 = sshll.u32 [#allocation6], 4
          %s569 = int_to_ptr.vmem [resolvable:$true] %s568
          %571 = dma.hbm_to_vmem [thread:$0]  %s3, 16, %s569, [#allocation5]
        $region24: #{lifting_net_forward.2} parent=11 // pred_fallthru
          _
        // Predicated region
        $region25: #{lifting_net_forward.2} parent=11 // pred_check
          %p572 = pneg %p147
        $region26: #{lifting_net_forward.2} parent=11 // pred_check_branch
          %574 = sbr.rel (%p572) target = $region28
        $region27: #{lifting_net_forward.2} parent=11 // pred_region
          %s576 = ssub.s32 256, 256
          %577 = vsyncadd [#allocation8], %s576
          %s578 = sshll.u32 [#allocation7], 4
          %s579 = int_to_ptr.vmem [resolvable:$true] %s578
          %584 = dma.hbm_to_vmem [thread:$0]  %s4, 256, %s579, [#allocation8], 128, 128, 8
        $region28: #{lifting_net_forward.2} parent=11 // pred_fallthru
          _
        // Predicated region
        $region29: #{lifting_net_forward.2} parent=11 // pred_check
          %p585 = pneg %p168
        $region30: #{lifting_net_forward.2} parent=11 // pred_check_branch
          %587 = sbr.rel (%p585) target = $region32
        $region31: #{lifting_net_forward.2} parent=11 // pred_region
          %s589 = ssub.s32 640, 640
          %590 = vsyncadd [#allocation8], %s589
          %s591 = sshll.u32 [#allocation9], 4
          %s592 = int_to_ptr.vmem [resolvable:$true] %s591
          %597 = dma.hbm_to_vmem [thread:$0]  %s5, 640, %s592, [#allocation8], 128, 128, 8
        $region32: #{lifting_net_forward.2} parent=11 // pred_fallthru
          _
        // Predicated region
        $region33: #{lifting_net_forward.2} parent=11 // pred_check
          %p598 = pneg %p189
        $region34: #{lifting_net_forward.2} parent=11 // pred_check_branch
          %600 = sbr.rel (%p598) target = $region36
        $region35: #{lifting_net_forward.2} parent=11 // pred_region
          %s602 = ssub.s32 16, 16
          %603 = vsyncadd [#allocation11], %s602
          %s605 = sshll.u32 [#allocation10], 4
          %s606 = int_to_ptr.vmem [resolvable:$true] %s605
          %608 = dma.hbm_to_vmem [thread:$0]  %s6, 16, %s606, [#allocation11]
        $region36: #{lifting_net_forward.2} parent=11 // pred_fallthru
          _
        // Predicated region
        $region37: #{lifting_net_forward.2} parent=11 // pred_check
          %p609 = pneg %p210
        $region38: #{lifting_net_forward.2} parent=11 // pred_check_branch
          %611 = sbr.rel (%p609) target = $region40
        $region39: #{lifting_net_forward.2} parent=11 // pred_region
          %s613 = ssub.s32 16, 16
          %614 = vsyncadd [#allocation11], %s613
          %s616 = sshll.u32 [#allocation12], 4
          %s617 = int_to_ptr.vmem [resolvable:$true] %s616
          %619 = dma.hbm_to_vmem [thread:$0]  %s7, 16, %s617, [#allocation11]
        $region40: #{lifting_net_forward.2} parent=11 // pred_fallthru
          _
        // Predicated region
        $region41: #{lifting_net_forward.2} parent=11 // pred_check
          %p620 = pneg %p231
        $region42: #{lifting_net_forward.2} parent=11 // pred_check_branch
          %622 = sbr.rel (%p620) target = $region44
        $region43: #{lifting_net_forward.2} parent=11 // pred_region
          _
        $region44: #{lifting_net_forward.2} parent=11 // pred_fallthru
          _
        // Predicated region
        $region45: #{lifting_net_forward.2} parent=11 // pred_check
          %p623 = pneg %p252
        $region46: #{lifting_net_forward.2} parent=11 // pred_check_branch
          %625 = sbr.rel (%p623) target = $region48
        $region47: #{lifting_net_forward.2} parent=11 // pred_region
          %s627 = ssub.s32 16, 16
          %628 = vsyncadd [#allocation14], %s627
          %s630 = sshll.u32 [#allocation13], 4
          %s631 = int_to_ptr.vmem [resolvable:$true] %s630
          %633 = dma.hbm_to_vmem [thread:$0]  %s9, 16, %s631, [#allocation14]
        $region48: #{lifting_net_forward.2} parent=11 // pred_fallthru
          _
        // Predicated region
        $region49: #{lifting_net_forward.2} parent=11 // pred_check
          %p634 = pneg %p273
        $region50: #{lifting_net_forward.2} parent=11 // pred_check_branch
          %636 = sbr.rel (%p634) target = $region52
        $region51: #{lifting_net_forward.2} parent=11 // pred_region
          _
        $region52: #{lifting_net_forward.2} parent=11 // pred_fallthru
          _
        // Predicated region
        $region53: #{lifting_net_forward.2} parent=11 // pred_check
          %p637 = pneg %p294
        $region54: #{lifting_net_forward.2} parent=11 // pred_check_branch
          %639 = sbr.rel (%p637) target = $region56
        $region55: #{lifting_net_forward.2} parent=11 // pred_region
          %s641 = ssub.s32 640, 640
          %642 = vsyncadd [#allocation14], %s641
          %s643 = sshll.u32 [#allocation15], 4
          %s644 = int_to_ptr.vmem [resolvable:$true] %s643
          %649 = dma.hbm_to_vmem [thread:$0]  %s11, 640, %s644, [#allocation14], 128, 128, 8
        $region56: #{lifting_net_forward.2} parent=11 // pred_fallthru
          _
        // Predicated region
        $region57: #{lifting_net_forward.2} parent=11 // pred_check
          %p650 = pneg %p315
        $region58: #{lifting_net_forward.2} parent=11 // pred_check_branch
          %652 = sbr.rel (%p650) target = $region60
        $region59: #{lifting_net_forward.2} parent=11 // pred_region
          %s654 = ssub.s32 1664, 1664
          %655 = vsyncadd [#allocation17], %s654
          %s656 = sshll.u32 [#allocation16], 4
          %s657 = int_to_ptr.vmem [resolvable:$true] %s656
          %662 = dma.hbm_to_vmem [thread:$0]  %s12, 1664, %s657, [#allocation17], 128, 128, 8
        $region60: #{lifting_net_forward.2} parent=11 // pred_fallthru
          _
        // Predicated region
        $region61: #{lifting_net_forward.2} parent=11 // pred_check
          %p663 = pneg %p336
        $region62: #{lifting_net_forward.2} parent=11 // pred_check_branch
          %665 = sbr.rel (%p663) target = $region64
        $region63: #{lifting_net_forward.2} parent=11 // pred_region
          _
        $region64: #{lifting_net_forward.2} parent=11 // pred_fallthru
          _
        // Predicated region
        $region65: #{lifting_net_forward.2} parent=11 // pred_check
          %p666 = pneg %p357
        $region66: #{lifting_net_forward.2} parent=11 // pred_check_branch
          %668 = sbr.rel (%p666) target = $region68
        $region67: #{lifting_net_forward.2} parent=11 // pred_region
          _
        $region68: #{lifting_net_forward.2} parent=11 // pred_fallthru
          _
        // Predicated region
        $region69: #{lifting_net_forward.2} parent=11 // pred_check
          %p669 = pneg %p378
        $region70: #{lifting_net_forward.2} parent=11 // pred_check_branch
          %671 = sbr.rel (%p669) target = $region72
        $region71: #{lifting_net_forward.2} parent=11 // pred_region
          %s673 = ssub.s32 3328, 3328
          %674 = vsyncadd [#allocation17], %s673
          %s675 = sshll.u32 [#allocation18], 4
          %s676 = int_to_ptr.vmem [resolvable:$true] %s675
          %681 = dma.hbm_to_vmem [thread:$0]  %s15, 3328, %s676, [#allocation17], 256, 256, 16
        $region72: #{lifting_net_forward.2} parent=11 // pred_fallthru
          _
        // Predicated region
        $region73: #{lifting_net_forward.2} parent=11 // pred_check
          %p682 = pneg %p399
        $region74: #{lifting_net_forward.2} parent=11 // pred_check_branch
          %684 = sbr.rel (%p682) target = $region76
        $region75: #{lifting_net_forward.2} parent=11 // pred_region
          _
        $region76: #{lifting_net_forward.2} parent=11 // pred_fallthru
          _
        // Predicated region
        $region77: #{lifting_net_forward.2} parent=11 // pred_check
          %p685 = pneg %p420
        $region78: #{lifting_net_forward.2} parent=11 // pred_check_branch
          %687 = sbr.rel (%p685) target = $region80
        $region79: #{lifting_net_forward.2} parent=11 // pred_region
          _
        $region80: #{lifting_net_forward.2} parent=11 // pred_fallthru
          _
        // Predicated region
        $region81: #{lifting_net_forward.2} parent=11 // pred_check
          %p688 = pneg %p441
        $region82: #{lifting_net_forward.2} parent=11 // pred_check_branch
          %690 = sbr.rel (%p688) target = $region84
        $region83: #{lifting_net_forward.2} parent=11 // pred_region
          %s692 = ssub.s32 3328, 3328
          %693 = vsyncadd [#allocation20], %s692
          %s694 = sshll.u32 [#allocation19], 4
          %s695 = int_to_ptr.vmem [resolvable:$true] %s694
          %700 = dma.hbm_to_vmem [thread:$0]  %s18, 3328, %s695, [#allocation20], 256, 256, 16
        $region84: #{lifting_net_forward.2} parent=11 // pred_fallthru
          _
        // Predicated region
        $region85: #{lifting_net_forward.2} parent=11 // pred_check
          %p701 = pneg %p462
        $region86: #{lifting_net_forward.2} parent=11 // pred_check_branch
          %703 = sbr.rel (%p701) target = $region88
        $region87: #{lifting_net_forward.2} parent=11 // pred_region
          %s705 = ssub.s32 8192, 8192
          %706 = vsyncadd [#allocation20], %s705
          %s707 = sshll.u32 [#allocation21], 4
          %s708 = int_to_ptr.vmem [resolvable:$true] %s707
          %713 = dma.hbm_to_vmem [thread:$0]  %s19, 8192, %s708, [#allocation20], 256, 256, 16
        $region88: #{lifting_net_forward.2} parent=11 // pred_fallthru
          _
        // Predicated region
        $region89: #{lifting_net_forward.2} parent=11 // pred_check
          %p714 = pneg %p483
        $region90: #{lifting_net_forward.2} parent=11 // pred_check_branch
          %716 = sbr.rel (%p714) target = $region92
        $region91: #{lifting_net_forward.2} parent=11 // pred_region
          _
        $region92: #{lifting_net_forward.2} parent=11 // pred_fallthru
          _
        // Predicated region
        $region93: #{lifting_net_forward.2} parent=11 // pred_check
          %p717 = pneg %p504
        $region94: #{lifting_net_forward.2} parent=11 // pred_check_branch
          %719 = sbr.rel (%p717) target = $region96
        $region95: #{lifting_net_forward.2} parent=11 // pred_region
          _
        $region96: #{lifting_net_forward.2} parent=11 // pred_fallthru
          _
      $region12: #{lifting_net_forward.2} parent=5 // pred_fallthru
        _
      %p720 = scmp.lt.s32.totalorder %s37, 2
      // Predicated region
      $region97: #{lifting_net_forward.2} parent=5 // pred_check
        %p721 = pneg %p720
      $region98: #{lifting_net_forward.2} parent=5 // pred_check_branch
        %723 = sbr.rel (%p721) target = $region100
      $region99: #{lifting_net_forward.2} parent=5 // pred_region
        // Predicated region
        $region101: #{lifting_net_forward.2} parent=99 // pred_check
          %p724 = pneg %p57
        $region102: #{lifting_net_forward.2} parent=99 // pred_check_branch
          %726 = sbr.rel (%p724) target = $region104
        $region103: #{lifting_net_forward.2} parent=99 // pred_region
          %s727 = sand.u32 %s47, 1
          %s728 = scalar_lea.sflag [#allocation3], %s727
          %s729 = sand.u32 %s47, 1
          %s730 = smul.addr %s729, 16
          %s731 = scalar_lea.vmem [#allocation2], %s730
          %s732 = smul.u32 2, %s37
          %s734 = ssub.s32 256, 256
          %735 = vsyncadd %s728, %s734
          %s736 = smul.addr %s732, 128
          %s737 = scalar_lea.hbm %s0, %s736
          %s738 = sshll.u32 %s731, 4
          %s739 = int_to_ptr.vmem [resolvable:$true] %s738
          %744 = dma.hbm_to_vmem [thread:$0]  %s737, 256, %s739, %s728, 128, 128, 8
        $region104: #{lifting_net_forward.2} parent=99 // pred_fallthru
          _
      $region100: #{lifting_net_forward.2} parent=5 // pred_fallthru
        _
      %p745 = scmp.le.s32.totalorder 1, %s37
      %p746 = scmp.lt.s32.totalorder %s37, 3
      %p747 = pnand %p745, %p746
      %p748 = pneg %p747
      // Predicated region
      $region105: #{lifting_net_forward.2} parent=5 // pred_check
        _
      $region106: #{lifting_net_forward.2} parent=5 // pred_check_branch
        %750 = sbr.rel (%p747) target = $region108
      $region107: #{lifting_net_forward.2} parent=5 // pred_region
        %s751 = ssub.s32 %s37, 1
        %s752 = sand.u32 %s50, 1
        %s753 = scalar_lea.sflag [#allocation3], %s752
        %s754 = sand.u32 %s50, 1
        %s755 = smul.addr %s754, 16
        %s756 = scalar_lea.vmem [#allocation2], %s755
        // Predicated region
        $region109: #{lifting_net_forward.2} parent=107 // pred_check
          %p757 = pneg %p63
        $region110: #{lifting_net_forward.2} parent=107 // pred_check_branch
          %759 = sbr.rel (%p757) target = $region112
        $region111: #{lifting_net_forward.2} parent=107 // pred_region
          %760 = dma.done %s753, 256
        $region112: #{lifting_net_forward.2} parent=107 // pred_fallthru
          _
        // Predicated region
        $region113: #{lifting_net_forward.2} parent=107 // pred_check
          %p761 = pneg %p84
        $region114: #{lifting_net_forward.2} parent=107 // pred_check_branch
          %763 = sbr.rel (%p761) target = $region116
        $region115: #{lifting_net_forward.2} parent=107 // pred_region
          %764 = dma.done [#allocation5], 256
        $region116: #{lifting_net_forward.2} parent=107 // pred_fallthru
          _
        // Predicated region
        $region117: #{lifting_net_forward.2} parent=107 // pred_check
          %p765 = pneg %p126
        $region118: #{lifting_net_forward.2} parent=107 // pred_check_branch
          %767 = sbr.rel (%p765) target = $region120
        $region119: #{lifting_net_forward.2} parent=107 // pred_region
          %768 = dma.done [#allocation5], 16
        $region120: #{lifting_net_forward.2} parent=107 // pred_fallthru
          _
        // Predicated region
        $region121: #{lifting_net_forward.2} parent=107 // pred_check
          %p769 = pneg %p147
        $region122: #{lifting_net_forward.2} parent=107 // pred_check_branch
          %771 = sbr.rel (%p769) target = $region124
        $region123: #{lifting_net_forward.2} parent=107 // pred_region
          %772 = dma.done [#allocation8], 256
        $region124: #{lifting_net_forward.2} parent=107 // pred_fallthru
          _
        // Predicated region
        $region125: #{lifting_net_forward.2} parent=107 // pred_check
          %p773 = pneg %p168
        $region126: #{lifting_net_forward.2} parent=107 // pred_check_branch
          %775 = sbr.rel (%p773) target = $region128
        $region127: #{lifting_net_forward.2} parent=107 // pred_region
          %776 = dma.done [#allocation8], 640
        $region128: #{lifting_net_forward.2} parent=107 // pred_fallthru
          _
        // Predicated region
        $region129: #{lifting_net_forward.2} parent=107 // pred_check
          %p777 = pneg %p189
        $region130: #{lifting_net_forward.2} parent=107 // pred_check_branch
          %779 = sbr.rel (%p777) target = $region132
        $region131: #{lifting_net_forward.2} parent=107 // pred_region
          %780 = dma.done [#allocation11], 16
        $region132: #{lifting_net_forward.2} parent=107 // pred_fallthru
          _
        // Predicated region
        $region133: #{lifting_net_forward.2} parent=107 // pred_check
          %p781 = pneg %p210
        $region134: #{lifting_net_forward.2} parent=107 // pred_check_branch
          %783 = sbr.rel (%p781) target = $region136
        $region135: #{lifting_net_forward.2} parent=107 // pred_region
          %784 = dma.done [#allocation11], 16
        $region136: #{lifting_net_forward.2} parent=107 // pred_fallthru
          _
        // Predicated region
        $region137: #{lifting_net_forward.2} parent=107 // pred_check
          %p785 = pneg %p252
        $region138: #{lifting_net_forward.2} parent=107 // pred_check_branch
          %787 = sbr.rel (%p785) target = $region140
        $region139: #{lifting_net_forward.2} parent=107 // pred_region
          %788 = dma.done [#allocation14], 16
        $region140: #{lifting_net_forward.2} parent=107 // pred_fallthru
          _
        // Predicated region
        $region141: #{lifting_net_forward.2} parent=107 // pred_check
          %p789 = pneg %p294
        $region142: #{lifting_net_forward.2} parent=107 // pred_check_branch
          %791 = sbr.rel (%p789) target = $region144
        $region143: #{lifting_net_forward.2} parent=107 // pred_region
          %792 = dma.done [#allocation14], 640
        $region144: #{lifting_net_forward.2} parent=107 // pred_fallthru
          _
        // Predicated region
        $region145: #{lifting_net_forward.2} parent=107 // pred_check
          %p793 = pneg %p315
        $region146: #{lifting_net_forward.2} parent=107 // pred_check_branch
          %795 = sbr.rel (%p793) target = $region148
        $region147: #{lifting_net_forward.2} parent=107 // pred_region
          %796 = dma.done [#allocation17], 1664
        $region148: #{lifting_net_forward.2} parent=107 // pred_fallthru
          _
        // Predicated region
        $region149: #{lifting_net_forward.2} parent=107 // pred_check
          %p797 = pneg %p378
        $region150: #{lifting_net_forward.2} parent=107 // pred_check_branch
          %799 = sbr.rel (%p797) target = $region152
        $region151: #{lifting_net_forward.2} parent=107 // pred_region
          %800 = dma.done [#allocation17], 3328
        $region152: #{lifting_net_forward.2} parent=107 // pred_fallthru
          _
        // Predicated region
        $region153: #{lifting_net_forward.2} parent=107 // pred_check
          %p801 = pneg %p441
        $region154: #{lifting_net_forward.2} parent=107 // pred_check_branch
          %803 = sbr.rel (%p801) target = $region156
        $region155: #{lifting_net_forward.2} parent=107 // pred_region
          %804 = dma.done [#allocation20], 3328
        $region156: #{lifting_net_forward.2} parent=107 // pred_fallthru
          _
        // Predicated region
        $region157: #{lifting_net_forward.2} parent=107 // pred_check
          %p805 = pneg %p462
        $region158: #{lifting_net_forward.2} parent=107 // pred_check_branch
          %807 = sbr.rel (%p805) target = $region160
        $region159: #{lifting_net_forward.2} parent=107 // pred_region
          %808 = dma.done [#allocation20], 8192
        $region160: #{lifting_net_forward.2} parent=107 // pred_fallthru
          _
        %s809 = sand.u32 %s50, 1
        %s810 = scalar_lea.sflag [#allocation3], %s809
        %s811 = sand.u32 %s50, 1
        %s812 = smul.addr %s811, 16
        %s813 = scalar_lea.vmem [#allocation2], %s812
        %p814 = pneg %p63
        %p815 = pneg %p60
        %p816 = pneg %p84
        %p817 = pneg %p81
        %p818 = pneg %p105
        %p819 = pneg %p102
        %p820 = pneg %p126
        %p821 = pneg %p123
        %p822 = pneg %p147
        %p823 = pneg %p144
        %p824 = pneg %p168
        %p825 = pneg %p165
        %p826 = pneg %p189
        %p827 = pneg %p186
        %p828 = pneg %p210
        %p829 = pneg %p207
        %p830 = pneg %p231
        %p831 = pneg %p228
        %p832 = pneg %p252
        %p833 = pneg %p249
        %p834 = pneg %p273
        %p835 = pneg %p270
        %p836 = pneg %p294
        %p837 = pneg %p291
        %p838 = pneg %p315
        %p839 = pneg %p312
        %p840 = pneg %p336
        %p841 = pneg %p333
        %p842 = pneg %p357
        %p843 = pneg %p354
        %p844 = pneg %p378
        %p845 = pneg %p375
        %p846 = pneg %p399
        %p847 = pneg %p396
        %p848 = pneg %p420
        %p849 = pneg %p417
        %p850 = pneg %p441
        %p851 = pneg %p438
        %p852 = pneg %p462
        %p853 = pneg %p459
        %p854 = pneg %p483
        %p855 = pneg %p480
        %p856 = pneg %p504
        %p857 = pneg %p501
        %p858 = pneg %p530
        %p859 = pneg %p527
        %s860 = smul.u32 2, %s42
        %p861 = scmp.lt.s32.totalorder %s860, 3
        %s862 = scalar_select %p861, %s860, 3
        %s863 = smul.addr %s862, 2
        %s864 = smul.addr %s863, 8
        %s865 = scalar_lea.vmem %s22, %s864
        %s866 = smul.u32 2, %s42
        %s867 = smul.u32 2, %s42
        %p868 = scmp.lt.s32.totalorder %s867, 3
        %s869 = scalar_select %p868, %s867, 3
        %s870 = smul.addr %s869, 2
        %s871 = smul.addr %s870, 8
        %s872 = scalar_lea.vmem %s22, %s871
        %s873 = smul.u32 2, %s42
        %v874 = vld [vmem:[%s756] sm:$0xff]
        %v875 = vld [vmem:[%s756 + $0x8] sm:$0xff]
        %v876 = vld [vmem:[#allocation4] sm:$0xff]
        %v877 = vld [vmem:[#allocation4 + $0x8] sm:$0xff]
        %vm878 = vcmask 130048
        %v880 = vsel %vm878, %v874, 0
        %v883 = vsel %vm878, %v875, 0
        %885 = vmatprep.subr.mxu0 0.0
        %886 = vmatpush1.msra.mxu0 %v876
        %887 = vmatprep.subr.mxu0 0.0
        %888 = vmatpush1.msra.mxu0 %v877
        %889 = vmatprep.subr.mxu0 0.0
        %890 = vmatpush1.msra.mxu0 0.0
        %891 = vmatprep.subr.mxu0 0.0
        %892 = vmatpush1.msra.mxu0 0.0
        %893 = vmatprep.subr.mxu0 0.0
        %894 = vmatpush1.msra.mxu0 0.0
        %895 = vmatprep.subr.mxu0 0.0
        %896 = vmatpush1.msra.mxu0 0.0
        %897 = vmatprep.subr.mxu0 0.0
        %898 = vmatpush1.msra.mxu0 0.0
        %899 = vmatprep.subr.mxu0 0.0
        %900 = vmatpush1.msra.mxu0 0.0
        %901 = vmatprep.subr.mxu0 0.0
        %902 = vmatpush1.msra.mxu0 0.0
        %903 = vmatprep.subr.mxu0 0.0
        %904 = vmatpush1.msra.mxu0 0.0
        %905 = vmatprep.subr.mxu0 0.0
        %906 = vmatpush1.msra.mxu0 0.0
        %907 = vmatprep.subr.mxu0 0.0
        %908 = vmatpush1.msra.mxu0 0.0
        %909 = vmatprep.subr.mxu0 0.0
        %910 = vmatpush1.msra.mxu0 0.0
        %911 = vmatprep.subr.mxu0 0.0
        %912 = vmatpush1.msra.mxu0 0.0
        %913 = vmatprep.subr.mxu0 0.0
        %914 = vmatpush1.msra.mxu0 0.0
        %915 = vmatprep.subr.mxu0 0.0
        %916 = vmatpush1.msra.mxu0 0.0
        %917 = vmatprep.subr.mxu0 0.0
        %918 = vmatpush1.msra.mxu0 0.0
        %919 = vmatprep.subr.mxu0 0.0
        %920 = vmatpush1.msra.mxu0 0.0
        %921 = vmatprep.subr.mxu0 0.0
        %922 = vmatpush1.msra.mxu0 0.0
        %923 = vmatprep.subr.mxu0 0.0
        %924 = vmatpush1.msra.mxu0 0.0
        %925 = vmatprep.subr.mxu0 0.0
        %926 = vmatpush1.msra.mxu0 0.0
        %927 = vmatprep.subr.mxu0 0.0
        %928 = vmatpush1.msra.mxu0 0.0
        %929 = vmatprep.subr.mxu0 0.0
        %930 = vmatpush1.msra.mxu0 0.0
        %931 = vmatprep.subr.mxu0 0.0
        %932 = vmatpush1.msra.mxu0 0.0
        %933 = vmatprep.subr.mxu0 0.0
        %934 = vmatpush1.msra.mxu0 0.0
        %935 = vmatprep.subr.mxu0 0.0
        %936 = vmatpush1.msra.mxu0 0.0
        %937 = vmatprep.subr.mxu0 0.0
        %938 = vmatpush1.msra.mxu0 0.0
        %939 = vmatprep.subr.mxu0 0.0
        %940 = vmatpush1.msra.mxu0 0.0
        %941 = vmatprep.subr.mxu0 0.0
        %942 = vmatpush1.msra.mxu0 0.0
        %943 = vmatprep.subr.mxu0 0.0
        %944 = vmatpush1.msra.mxu0 0.0
        %945 = vmatprep.subr.mxu0 0.0
        %946 = vmatpush1.msra.mxu0 0.0
        %947 = vmatprep.subr.mxu0 0.0
        %948 = vmatpush1.msra.mxu0 0.0
        %949 = vmatprep.mubr.f32.mxu0 0.0
        %950 = vmatmul.mubr.f32.gmra.mrb[0].mxu0 %v880
        %v951 = vpop.f32.mrb[0].mxu0
        %v952 = vadd.f32 0.0, %v951
        %v953 = vpop.f32.mrb[0].mxu0
        %954 = vmatprep.mubr.f32.mxu0 0.0
        %955 = vmatmul.mubr.f32.gmra.mrb[0].mxu0 %v883
        %v956 = vpop.f32.mrb[0].mxu0
        %v957 = vadd.f32 0.0, %v956
        %v958 = vpop.f32.mrb[0].mxu0
        %959 = vdwg.mxu0
        %v960 = vld [vmem:[%s2] sm:$0x1]
        %v962 = vlaneseq
        %v963 = vshrl.u32 %v962, 7
        %v964 = vsub.s32 0, %v963
        %v965 = vrot.slane %v960, %v964
        %v967 = vmul.f32 %v952, %v965
        %v968 = vmul.f32 %v957, %v965
        %v969 = vld [vmem:[#allocation6] sm:$0x1]
        %v971 = vlaneseq
        %v972 = vshrl.u32 %v971, 7
        %v973 = vsub.s32 0, %v972
        %v974 = vrot.slane %v969, %v973
        %v976 = vadd.f32 %v967, %v974
        %v977 = vadd.f32 %v968, %v974
        %v978 = vmax.f32 %v976, 0.0
        %v979 = vmax.f32 %v977, 0.0
        %v980 = vld [vmem:[#allocation7] sm:$0xff]
        %v981 = vld [vmem:[#allocation7 + $0x8] sm:$0xff]
        %982 = vmatprep.subr.mxu0 0.0
        %983 = vmatpush1.msra.mxu0 %v980
        %984 = vmatprep.subr.mxu0 0.0
        %985 = vmatpush1.msra.mxu0 %v981
        %986 = vmatprep.subr.mxu0 0.0
        %987 = vmatpush1.msra.mxu0 0.0
        %988 = vmatprep.subr.mxu0 0.0
        %989 = vmatpush1.msra.mxu0 0.0
        %990 = vmatprep.subr.mxu0 0.0
        %991 = vmatpush1.msra.mxu0 0.0
        %992 = vmatprep.subr.mxu0 0.0
        %993 = vmatpush1.msra.mxu0 0.0
        %994 = vmatprep.subr.mxu0 0.0
        %995 = vmatpush1.msra.mxu0 0.0
        %996 = vmatprep.subr.mxu0 0.0
        %997 = vmatpush1.msra.mxu0 0.0
        %998 = vmatprep.subr.mxu0 0.0
        %999 = vmatpush1.msra.mxu0 0.0
        %1000 = vmatprep.subr.mxu0 0.0
        %1001 = vmatpush1.msra.mxu0 0.0
        %1002 = vmatprep.subr.mxu0 0.0
        %1003 = vmatpush1.msra.mxu0 0.0
        %1004 = vmatprep.subr.mxu0 0.0
        %1005 = vmatpush1.msra.mxu0 0.0
        %1006 = vmatprep.subr.mxu0 0.0
        %1007 = vmatpush1.msra.mxu0 0.0
        %1008 = vmatprep.subr.mxu0 0.0
        %1009 = vmatpush1.msra.mxu0 0.0
        %1010 = vmatprep.subr.mxu0 0.0
        %1011 = vmatpush1.msra.mxu0 0.0
        %1012 = vmatprep.subr.mxu0 0.0
        %1013 = vmatpush1.msra.mxu0 0.0
        %1014 = vmatprep.subr.mxu0 0.0
        %1015 = vmatpush1.msra.mxu0 0.0
        %1016 = vmatprep.subr.mxu0 0.0
        %1017 = vmatpush1.msra.mxu0 0.0
        %1018 = vmatprep.subr.mxu0 0.0
        %1019 = vmatpush1.msra.mxu0 0.0
        %1020 = vmatprep.subr.mxu0 0.0
        %1021 = vmatpush1.msra.mxu0 0.0
        %1022 = vmatprep.subr.mxu0 0.0
        %1023 = vmatpush1.msra.mxu0 0.0
        %1024 = vmatprep.subr.mxu0 0.0
        %1025 = vmatpush1.msra.mxu0 0.0
        %1026 = vmatprep.subr.mxu0 0.0
        %1027 = vmatpush1.msra.mxu0 0.0
        %1028 = vmatprep.subr.mxu0 0.0
        %1029 = vmatpush1.msra.mxu0 0.0
        %1030 = vmatprep.subr.mxu0 0.0
        %1031 = vmatpush1.msra.mxu0 0.0
        %1032 = vmatprep.subr.mxu0 0.0
        %1033 = vmatpush1.msra.mxu0 0.0
        %1034 = vmatprep.subr.mxu0 0.0
        %1035 = vmatpush1.msra.mxu0 0.0
        %1036 = vmatprep.subr.mxu0 0.0
        %1037 = vmatpush1.msra.mxu0 0.0
        %1038 = vmatprep.subr.mxu0 0.0
        %1039 = vmatpush1.msra.mxu0 0.0
        %1040 = vmatprep.subr.mxu0 0.0
        %1041 = vmatpush1.msra.mxu0 0.0
        %1042 = vmatprep.subr.mxu0 0.0
        %1043 = vmatpush1.msra.mxu0 0.0
        %1044 = vmatprep.subr.mxu0 0.0
        %1045 = vmatpush1.msra.mxu0 0.0
        %1046 = vmatprep.mubr.f32.mxu0 0.0
        %1047 = vmatmul.mubr.f32.gmra.mrb[0].mxu0 %v880
        %v1048 = vpop.f32.mrb[0].mxu0
        %v1049 = vadd.f32 0.0, %v1048
        %v1050 = vpop.f32.mrb[0].mxu0
        %1051 = vmatprep.mubr.f32.mxu0 0.0
        %1052 = vmatmul.mubr.f32.gmra.mrb[0].mxu0 %v883
        %v1053 = vpop.f32.mrb[0].mxu0
        %v1054 = vadd.f32 0.0, %v1053
        %v1055 = vpop.f32.mrb[0].mxu0
        %1056 = vdwg.mxu0
        %v1057 = vsub.f32 %v1049, %v978
        %v1058 = vsub.f32 %v1054, %v979
        %v1059 = vld [vmem:[#allocation9] sm:$0xff]
        %v1060 = vld [vmem:[#allocation9 + $0x8] sm:$0xff]
        %v1061 = vld [vmem:[#allocation9 + $0x10] sm:$0xff]
        %v1062 = vld [vmem:[#allocation9 + $0x18] sm:$0xff]
        %v1063 = vld [vmem:[#allocation9 + $0x20] sm:$0xff]
        %vm1064 = vcmask 326656
        %v1066 = vsel %vm1064, %v1057, 0
        %v1069 = vsel %vm1064, %v1058, 0
        %1071 = vmatprep.subr.mxu0 0.0
        %1072 = vmatpush1.msra.mxu0 %v1059
        %1073 = vmatprep.subr.mxu0 0.0
        %1074 = vmatpush1.msra.mxu0 %v1060
        %1075 = vmatprep.subr.mxu0 0.0
        %1076 = vmatpush1.msra.mxu0 %v1061
        %1077 = vmatprep.subr.mxu0 0.0
        %1078 = vmatpush1.msra.mxu0 %v1062
        %1079 = vmatprep.subr.mxu0 0.0
        %1080 = vmatpush1.msra.mxu0 %v1063
        %1081 = vmatprep.subr.mxu0 0.0
        %1082 = vmatpush1.msra.mxu0 0.0
        %1083 = vmatprep.subr.mxu0 0.0
        %1084 = vmatpush1.msra.mxu0 0.0
        %1085 = vmatprep.subr.mxu0 0.0
        %1086 = vmatpush1.msra.mxu0 0.0
        %1087 = vmatprep.subr.mxu0 0.0
        %1088 = vmatpush1.msra.mxu0 0.0
        %1089 = vmatprep.subr.mxu0 0.0
        %1090 = vmatpush1.msra.mxu0 0.0
        %1091 = vmatprep.subr.mxu0 0.0
        %1092 = vmatpush1.msra.mxu0 0.0
        %1093 = vmatprep.subr.mxu0 0.0
        %1094 = vmatpush1.msra.mxu0 0.0
        %1095 = vmatprep.subr.mxu0 0.0
        %1096 = vmatpush1.msra.mxu0 0.0
        %1097 = vmatprep.subr.mxu0 0.0
        %1098 = vmatpush1.msra.mxu0 0.0
        %1099 = vmatprep.subr.mxu0 0.0
        %1100 = vmatpush1.msra.mxu0 0.0
        %1101 = vmatprep.subr.mxu0 0.0
        %1102 = vmatpush1.msra.mxu0 0.0
        %1103 = vmatprep.subr.mxu0 0.0
        %1104 = vmatpush1.msra.mxu0 0.0
        %1105 = vmatprep.subr.mxu0 0.0
        %1106 = vmatpush1.msra.mxu0 0.0
        %1107 = vmatprep.subr.mxu0 0.0
        %1108 = vmatpush1.msra.mxu0 0.0
        %1109 = vmatprep.subr.mxu0 0.0
        %1110 = vmatpush1.msra.mxu0 0.0
        %1111 = vmatprep.subr.mxu0 0.0
        %1112 = vmatpush1.msra.mxu0 0.0
        %1113 = vmatprep.subr.mxu0 0.0
        %1114 = vmatpush1.msra.mxu0 0.0
        %1115 = vmatprep.subr.mxu0 0.0
        %1116 = vmatpush1.msra.mxu0 0.0
        %1117 = vmatprep.subr.mxu0 0.0
        %1118 = vmatpush1.msra.mxu0 0.0
        %1119 = vmatprep.subr.mxu0 0.0
        %1120 = vmatpush1.msra.mxu0 0.0
        %1121 = vmatprep.subr.mxu0 0.0
        %1122 = vmatpush1.msra.mxu0 0.0
        %1123 = vmatprep.subr.mxu0 0.0
        %1124 = vmatpush1.msra.mxu0 0.0
        %1125 = vmatprep.subr.mxu0 0.0
        %1126 = vmatpush1.msra.mxu0 0.0
        %1127 = vmatprep.subr.mxu0 0.0
        %1128 = vmatpush1.msra.mxu0 0.0
        %1129 = vmatprep.subr.mxu0 0.0
        %1130 = vmatpush1.msra.mxu0 0.0
        %1131 = vmatprep.subr.mxu0 0.0
        %1132 = vmatpush1.msra.mxu0 0.0
        %1133 = vmatprep.subr.mxu0 0.0
        %1134 = vmatpush1.msra.mxu0 0.0
        %1135 = vmatprep.mubr.f32.mxu0 0.0
        %1136 = vmatmul.mubr.f32.gmra.mrb[0].mxu0 %v1066
        %v1137 = vpop.f32.mrb[0].mxu0
        %v1138 = vadd.f32 0.0, %v1137
        %v1139 = vpop.f32.mrb[0].mxu0
        %1140 = vmatprep.mubr.f32.mxu0 0.0
        %1141 = vmatmul.mubr.f32.gmra.mrb[0].mxu0 %v1069
        %v1142 = vpop.f32.mrb[0].mxu0
        %v1143 = vadd.f32 0.0, %v1142
        %v1144 = vpop.f32.mrb[0].mxu0
        %1145 = vdwg.mxu0
        %v1146 = vld [vmem:[#allocation10] sm:$0x1]
        %v1148 = vlaneseq
        %v1149 = vshrl.u32 %v1148, 7
        %v1150 = vsub.s32 0, %v1149
        %v1151 = vrot.slane %v1146, %v1150
        %v1153 = vmul.f32 %v1138, %v1151
        %v1154 = vmul.f32 %v1143, %v1151
        %v1155 = vld [vmem:[#allocation12] sm:$0x1]
        %v1157 = vlaneseq
        %v1158 = vshrl.u32 %v1157, 7
        %v1159 = vsub.s32 0, %v1158
        %v1160 = vrot.slane %v1155, %v1159
        %v1162 = vadd.f32 %v1153, %v1160
        %v1163 = vadd.f32 %v1154, %v1160
        %v1164 = vmax.f32 %v1162, 0.0
        %v1165 = vmax.f32 %v1163, 0.0
        %v1166 = vadd.f32 %v978, %v1164
        %v1167 = vadd.f32 %v979, %v1165
        %v1168 = vld [vmem:[%s8] sm:$0xff]
        %v1169 = vld [vmem:[%s8 + $0x8] sm:$0xff]
        %v1170 = vld [vmem:[%s8 + $0x10] sm:$0xff]
        %v1171 = vld [vmem:[%s8 + $0x18] sm:$0xff]
        %v1172 = vld [vmem:[%s8 + $0x20] sm:$0xff]
        %v1174 = vsel %vm1064, %v1166, 0
        %v1177 = vsel %vm1064, %v1167, 0
        %1179 = vmatprep.subr.mxu0 0.0
        %1180 = vmatpush1.msra.mxu0 %v1168
        %1181 = vmatprep.subr.mxu0 0.0
        %1182 = vmatpush1.msra.mxu0 %v1169
        %1183 = vmatprep.subr.mxu0 0.0
        %1184 = vmatpush1.msra.mxu0 %v1170
        %1185 = vmatprep.subr.mxu0 0.0
        %1186 = vmatpush1.msra.mxu0 %v1171
        %1187 = vmatprep.subr.mxu0 0.0
        %1188 = vmatpush1.msra.mxu0 %v1172
        %1189 = vmatprep.subr.mxu0 0.0
        %1190 = vmatpush1.msra.mxu0 0.0
        %1191 = vmatprep.subr.mxu0 0.0
        %1192 = vmatpush1.msra.mxu0 0.0
        %1193 = vmatprep.subr.mxu0 0.0
        %1194 = vmatpush1.msra.mxu0 0.0
        %1195 = vmatprep.subr.mxu0 0.0
        %1196 = vmatpush1.msra.mxu0 0.0
        %1197 = vmatprep.subr.mxu0 0.0
        %1198 = vmatpush1.msra.mxu0 0.0
        %1199 = vmatprep.subr.mxu0 0.0
        %1200 = vmatpush1.msra.mxu0 0.0
        %1201 = vmatprep.subr.mxu0 0.0
        %1202 = vmatpush1.msra.mxu0 0.0
        %1203 = vmatprep.subr.mxu0 0.0
        %1204 = vmatpush1.msra.mxu0 0.0
        %1205 = vmatprep.subr.mxu0 0.0
        %1206 = vmatpush1.msra.mxu0 0.0
        %1207 = vmatprep.subr.mxu0 0.0
        %1208 = vmatpush1.msra.mxu0 0.0
        %1209 = vmatprep.subr.mxu0 0.0
        %1210 = vmatpush1.msra.mxu0 0.0
        %1211 = vmatprep.subr.mxu0 0.0
        %1212 = vmatpush1.msra.mxu0 0.0
        %1213 = vmatprep.subr.mxu0 0.0
        %1214 = vmatpush1.msra.mxu0 0.0
        %1215 = vmatprep.subr.mxu0 0.0
        %1216 = vmatpush1.msra.mxu0 0.0
        %1217 = vmatprep.subr.mxu0 0.0
        %1218 = vmatpush1.msra.mxu0 0.0
        %1219 = vmatprep.subr.mxu0 0.0
        %1220 = vmatpush1.msra.mxu0 0.0
        %1221 = vmatprep.subr.mxu0 0.0
        %1222 = vmatpush1.msra.mxu0 0.0
        %1223 = vmatprep.subr.mxu0 0.0
        %1224 = vmatpush1.msra.mxu0 0.0
        %1225 = vmatprep.subr.mxu0 0.0
        %1226 = vmatpush1.msra.mxu0 0.0
        %1227 = vmatprep.subr.mxu0 0.0
        %1228 = vmatpush1.msra.mxu0 0.0
        %1229 = vmatprep.subr.mxu0 0.0
        %1230 = vmatpush1.msra.mxu0 0.0
        %1231 = vmatprep.subr.mxu0 0.0
        %1232 = vmatpush1.msra.mxu0 0.0
        %1233 = vmatprep.subr.mxu0 0.0
        %1234 = vmatpush1.msra.mxu0 0.0
        %1235 = vmatprep.subr.mxu0 0.0
        %1236 = vmatpush1.msra.mxu0 0.0
        %1237 = vmatprep.subr.mxu0 0.0
        %1238 = vmatpush1.msra.mxu0 0.0
        %1239 = vmatprep.subr.mxu0 0.0
        %1240 = vmatpush1.msra.mxu0 0.0
        %1241 = vmatprep.subr.mxu0 0.0
        %1242 = vmatpush1.msra.mxu0 0.0
        %1243 = vmatprep.mubr.f32.mxu0 0.0
        %1244 = vmatmul.mubr.f32.gmra.mrb[0].mxu0 %v1174
        %v1245 = vpop.f32.mrb[0].mxu0
        %v1246 = vadd.f32 0.0, %v1245
        %v1247 = vpop.f32.mrb[0].mxu0
        %1248 = vmatprep.mubr.f32.mxu0 0.0
        %1249 = vmatmul.mubr.f32.gmra.mrb[0].mxu0 %v1177
        %v1250 = vpop.f32.mrb[0].mxu0
        %v1251 = vadd.f32 0.0, %v1250
        %v1252 = vpop.f32.mrb[0].mxu0
        %1253 = vdwg.mxu0
        %v1254 = vld [vmem:[#allocation13] sm:$0x1]
        %v1256 = vlaneseq
        %v1257 = vshrl.u32 %v1256, 7
        %v1258 = vsub.s32 0, %v1257
        %v1259 = vrot.slane %v1254, %v1258
        %v1261 = vmul.f32 %v1246, %v1259
        %v1262 = vmul.f32 %v1251, %v1259
        %v1263 = vld [vmem:[%s10] sm:$0x1]
        %v1265 = vlaneseq
        %v1266 = vshrl.u32 %v1265, 7
        %v1267 = vsub.s32 0, %v1266
        %v1268 = vrot.slane %v1263, %v1267
        %v1270 = vadd.f32 %v1261, %v1268
        %v1271 = vadd.f32 %v1262, %v1268
        %v1272 = vmax.f32 %v1270, 0.0
        %v1273 = vmax.f32 %v1271, 0.0
        %v1274 = vld [vmem:[#allocation15] sm:$0xff]
        %v1275 = vld [vmem:[#allocation15 + $0x8] sm:$0xff]
        %v1276 = vld [vmem:[#allocation15 + $0x10] sm:$0xff]
        %v1277 = vld [vmem:[#allocation15 + $0x18] sm:$0xff]
        %v1278 = vld [vmem:[#allocation15 + $0x20] sm:$0xff]
        %1279 = vmatprep.subr.mxu0 0.0
        %1280 = vmatpush1.msra.mxu0 %v1274
        %1281 = vmatprep.subr.mxu0 0.0
        %1282 = vmatpush1.msra.mxu0 %v1275
        %1283 = vmatprep.subr.mxu0 0.0
        %1284 = vmatpush1.msra.mxu0 %v1276
        %1285 = vmatprep.subr.mxu0 0.0
        %1286 = vmatpush1.msra.mxu0 %v1277
        %1287 = vmatprep.subr.mxu0 0.0
        %1288 = vmatpush1.msra.mxu0 %v1278
        %1289 = vmatprep.subr.mxu0 0.0
        %1290 = vmatpush1.msra.mxu0 0.0
        %1291 = vmatprep.subr.mxu0 0.0
        %1292 = vmatpush1.msra.mxu0 0.0
        %1293 = vmatprep.subr.mxu0 0.0
        %1294 = vmatpush1.msra.mxu0 0.0
        %1295 = vmatprep.subr.mxu0 0.0
        %1296 = vmatpush1.msra.mxu0 0.0
        %1297 = vmatprep.subr.mxu0 0.0
        %1298 = vmatpush1.msra.mxu0 0.0
        %1299 = vmatprep.subr.mxu0 0.0
        %1300 = vmatpush1.msra.mxu0 0.0
        %1301 = vmatprep.subr.mxu0 0.0
        %1302 = vmatpush1.msra.mxu0 0.0
        %1303 = vmatprep.subr.mxu0 0.0
        %1304 = vmatpush1.msra.mxu0 0.0
        %1305 = vmatprep.subr.mxu0 0.0
        %1306 = vmatpush1.msra.mxu0 0.0
        %1307 = vmatprep.subr.mxu0 0.0
        %1308 = vmatpush1.msra.mxu0 0.0
        %1309 = vmatprep.subr.mxu0 0.0
        %1310 = vmatpush1.msra.mxu0 0.0
        %1311 = vmatprep.subr.mxu0 0.0
        %1312 = vmatpush1.msra.mxu0 0.0
        %1313 = vmatprep.subr.mxu0 0.0
        %1314 = vmatpush1.msra.mxu0 0.0
        %1315 = vmatprep.subr.mxu0 0.0
        %1316 = vmatpush1.msra.mxu0 0.0
        %1317 = vmatprep.subr.mxu0 0.0
        %1318 = vmatpush1.msra.mxu0 0.0
        %1319 = vmatprep.subr.mxu0 0.0
        %1320 = vmatpush1.msra.mxu0 0.0
        %1321 = vmatprep.subr.mxu0 0.0
        %1322 = vmatpush1.msra.mxu0 0.0
        %1323 = vmatprep.subr.mxu0 0.0
        %1324 = vmatpush1.msra.mxu0 0.0
        %1325 = vmatprep.subr.mxu0 0.0
        %1326 = vmatpush1.msra.mxu0 0.0
        %1327 = vmatprep.subr.mxu0 0.0
        %1328 = vmatpush1.msra.mxu0 0.0
        %1329 = vmatprep.subr.mxu0 0.0
        %1330 = vmatpush1.msra.mxu0 0.0
        %1331 = vmatprep.subr.mxu0 0.0
        %1332 = vmatpush1.msra.mxu0 0.0
        %1333 = vmatprep.subr.mxu0 0.0
        %1334 = vmatpush1.msra.mxu0 0.0
        %1335 = vmatprep.subr.mxu0 0.0
        %1336 = vmatpush1.msra.mxu0 0.0
        %1337 = vmatprep.subr.mxu0 0.0
        %1338 = vmatpush1.msra.mxu0 0.0
        %1339 = vmatprep.subr.mxu0 0.0
        %1340 = vmatpush1.msra.mxu0 0.0
        %1341 = vmatprep.subr.mxu0 0.0
        %1342 = vmatpush1.msra.mxu0 0.0
        %1343 = vmatprep.mubr.f32.mxu0 0.0
        %1344 = vmatmul.mubr.f32.gmra.mrb[0].mxu0 %v1174
        %v1345 = vpop.f32.mrb[0].mxu0
        %v1346 = vadd.f32 0.0, %v1345
        %v1347 = vpop.f32.mrb[0].mxu0
        %1348 = vmatprep.mubr.f32.mxu0 0.0
        %1349 = vmatmul.mubr.f32.gmra.mrb[0].mxu0 %v1177
        %v1350 = vpop.f32.mrb[0].mxu0
        %v1351 = vadd.f32 0.0, %v1350
        %v1352 = vpop.f32.mrb[0].mxu0
        %1353 = vdwg.mxu0
        %v1354 = vsub.f32 %v1346, %v1272
        %v1355 = vsub.f32 %v1351, %v1273
        %v1356 = vld [vmem:[#allocation16] sm:$0xff]
        %v1357 = vld [vmem:[#allocation16 + $0x8] sm:$0xff]
        %v1358 = vld [vmem:[#allocation16 + $0x10] sm:$0xff]
        %v1359 = vld [vmem:[#allocation16 + $0x18] sm:$0xff]
        %v1360 = vld [vmem:[#allocation16 + $0x20] sm:$0xff]
        %v1361 = vld [vmem:[#allocation16 + $0x28] sm:$0xff]
        %v1362 = vld [vmem:[#allocation16 + $0x30] sm:$0xff]
        %v1363 = vld [vmem:[#allocation16 + $0x38] sm:$0xff]
        %v1364 = vld [vmem:[#allocation16 + $0x40] sm:$0xff]
        %v1365 = vld [vmem:[#allocation16 + $0x48] sm:$0xff]
        %v1366 = vld [vmem:[#allocation16 + $0x50] sm:$0xff]
        %v1367 = vld [vmem:[#allocation16 + $0x58] sm:$0xff]
        %v1368 = vld [vmem:[#allocation16 + $0x60] sm:$0xf]
        %vm1369 = vcmask 818176
        %v1371 = vsel %vm1369, %v1354, 0
        %v1374 = vsel %vm1369, %v1355, 0
        %vm1376 = vcmask 1043456
        %v1378 = vsel %vm1376, %v1368, 0
        %1380 = vmatprep.subr.mxu0 0.0
        %1381 = vmatpush1.msra.mxu0 %v1356
        %1382 = vmatprep.subr.mxu0 0.0
        %1383 = vmatpush1.msra.mxu0 %v1357
        %1384 = vmatprep.subr.mxu0 0.0
        %1385 = vmatpush1.msra.mxu0 %v1358
        %1386 = vmatprep.subr.mxu0 0.0
        %1387 = vmatpush1.msra.mxu0 %v1359
        %1388 = vmatprep.subr.mxu0 0.0
        %1389 = vmatpush1.msra.mxu0 %v1360
        %1390 = vmatprep.subr.mxu0 0.0
        %1391 = vmatpush1.msra.mxu0 %v1361
        %1392 = vmatprep.subr.mxu0 0.0
        %1393 = vmatpush1.msra.mxu0 %v1362
        %1394 = vmatprep.subr.mxu0 0.0
        %1395 = vmatpush1.msra.mxu0 %v1363
        %1396 = vmatprep.subr.mxu0 0.0
        %1397 = vmatpush1.msra.mxu0 %v1364
        %1398 = vmatprep.subr.mxu0 0.0
        %1399 = vmatpush1.msra.mxu0 %v1365
        %1400 = vmatprep.subr.mxu0 0.0
        %1401 = vmatpush1.msra.mxu0 %v1366
        %1402 = vmatprep.subr.mxu0 0.0
        %1403 = vmatpush1.msra.mxu0 %v1367
        %1404 = vmatprep.subr.mxu0 0.0
        %1405 = vmatpush1.msra.mxu0 %v1378
        %1406 = vmatprep.subr.mxu0 0.0
        %1407 = vmatpush1.msra.mxu0 0.0
        %1408 = vmatprep.subr.mxu0 0.0
        %1409 = vmatpush1.msra.mxu0 0.0
        %1410 = vmatprep.subr.mxu0 0.0
        %1411 = vmatpush1.msra.mxu0 0.0
        %1412 = vmatprep.subr.mxu0 0.0
        %1413 = vmatpush1.msra.mxu0 0.0
        %1414 = vmatprep.subr.mxu0 0.0
        %1415 = vmatpush1.msra.mxu0 0.0
        %1416 = vmatprep.subr.mxu0 0.0
        %1417 = vmatpush1.msra.mxu0 0.0
        %1418 = vmatprep.subr.mxu0 0.0
        %1419 = vmatpush1.msra.mxu0 0.0
        %1420 = vmatprep.subr.mxu0 0.0
        %1421 = vmatpush1.msra.mxu0 0.0
        %1422 = vmatprep.subr.mxu0 0.0
        %1423 = vmatpush1.msra.mxu0 0.0
        %1424 = vmatprep.subr.mxu0 0.0
        %1425 = vmatpush1.msra.mxu0 0.0
        %1426 = vmatprep.subr.mxu0 0.0
        %1427 = vmatpush1.msra.mxu0 0.0
        %1428 = vmatprep.subr.mxu0 0.0
        %1429 = vmatpush1.msra.mxu0 0.0
        %1430 = vmatprep.subr.mxu0 0.0
        %1431 = vmatpush1.msra.mxu0 0.0
        %1432 = vmatprep.subr.mxu0 0.0
        %1433 = vmatpush1.msra.mxu0 0.0
        %1434 = vmatprep.subr.mxu0 0.0
        %1435 = vmatpush1.msra.mxu0 0.0
        %1436 = vmatprep.subr.mxu0 0.0
        %1437 = vmatpush1.msra.mxu0 0.0
        %1438 = vmatprep.subr.mxu0 0.0
        %1439 = vmatpush1.msra.mxu0 0.0
        %1440 = vmatprep.subr.mxu0 0.0
        %1441 = vmatpush1.msra.mxu0 0.0
        %1442 = vmatprep.subr.mxu0 0.0
        %1443 = vmatpush1.msra.mxu0 0.0
        %1444 = vmatprep.mubr.f32.mxu0 0.0
        %1445 = vmatmul.mubr.f32.gmra.mrb[0].mxu0 %v1371
        %v1446 = vpop.f32.mrb[0].mxu0
        %v1447 = vadd.f32 0.0, %v1446
        %v1448 = vpop.f32.mrb[0].mxu0
        %1449 = vmatprep.mubr.f32.mxu0 0.0
        %1450 = vmatmul.mubr.f32.gmra.mrb[0].mxu0 %v1374
        %v1451 = vpop.f32.mrb[0].mxu0
        %v1452 = vadd.f32 0.0, %v1451
        %v1453 = vpop.f32.mrb[0].mxu0
        %1454 = vdwg.mxu0
        %v1455 = vld [vmem:[%s13] sm:$0x1]
        %v1457 = vlaneseq
        %v1458 = vshrl.u32 %v1457, 7
        %v1459 = vsub.s32 0, %v1458
        %v1460 = vrot.slane %v1455, %v1459
        %v1462 = vmul.f32 %v1447, %v1460
        %v1463 = vmul.f32 %v1452, %v1460
        %v1464 = vld [vmem:[%s14] sm:$0x1]
        %v1466 = vlaneseq
        %v1467 = vshrl.u32 %v1466, 7
        %v1468 = vsub.s32 0, %v1467
        %v1469 = vrot.slane %v1464, %v1468
        %v1471 = vadd.f32 %v1462, %v1469
        %v1472 = vadd.f32 %v1463, %v1469
        %v1473 = vmax.f32 %v1471, 0.0
        %v1474 = vmax.f32 %v1472, 0.0
        %v1475 = vadd.f32 %v1272, %v1473
        %v1476 = vadd.f32 %v1273, %v1474
        %v1477 = vld [vmem:[#allocation18] sm:$0xff]
        %v1478 = vld [vmem:[#allocation18 + $0x8] sm:$0xff]
        %v1479 = vld [vmem:[#allocation18 + $0x10] sm:$0xff]
        %v1480 = vld [vmem:[#allocation18 + $0x18] sm:$0xff]
        %v1481 = vld [vmem:[#allocation18 + $0x20] sm:$0xff]
        %v1482 = vld [vmem:[#allocation18 + $0x28] sm:$0xff]
        %v1483 = vld [vmem:[#allocation18 + $0x30] sm:$0xff]
        %v1484 = vld [vmem:[#allocation18 + $0x38] sm:$0xff]
        %v1485 = vld [vmem:[#allocation18 + $0x40] sm:$0xff]
        %v1486 = vld [vmem:[#allocation18 + $0x48] sm:$0xff]
        %v1487 = vld [vmem:[#allocation18 + $0x50] sm:$0xff]
        %v1488 = vld [vmem:[#allocation18 + $0x58] sm:$0xff]
        %v1489 = vld [vmem:[#allocation18 + $0x60] sm:$0xff]
        %v1490 = vld [vmem:[#allocation18 + $0x68] sm:$0xff]
        %v1491 = vld [vmem:[#allocation18 + $0x70] sm:$0xff]
        %v1492 = vld [vmem:[#allocation18 + $0x78] sm:$0xff]
        %v1493 = vld [vmem:[#allocation18 + $0x80] sm:$0xff]
        %v1494 = vld [vmem:[#allocation18 + $0x88] sm:$0xff]
        %v1495 = vld [vmem:[#allocation18 + $0x90] sm:$0xff]
        %v1496 = vld [vmem:[#allocation18 + $0x98] sm:$0xff]
        %v1497 = vld [vmem:[#allocation18 + $0xa0] sm:$0xff]
        %v1498 = vld [vmem:[#allocation18 + $0xa8] sm:$0xff]
        %v1499 = vld [vmem:[#allocation18 + $0xb0] sm:$0xff]
        %v1500 = vld [vmem:[#allocation18 + $0xb8] sm:$0xff]
        %v1501 = vld [vmem:[#allocation18 + $0xc0] sm:$0xf]
        %v1502 = vld [vmem:[#allocation18 + $0xc8] sm:$0xf]
        %v1504 = vsel %vm1369, %v1475, 0
        %v1507 = vsel %vm1369, %v1476, 0
        %v1510 = vsel %vm1376, %v1501, 0
        %v1513 = vsel %vm1376, %v1502, 0
        %1515 = vmatprep.subr.mxu0 %v1478
        %1516 = vmatpush1.msra.mxu0 %v1477
        %1517 = vmatprep.subr.mxu0 %v1480
        %1518 = vmatpush1.msra.mxu0 %v1479
        %1519 = vmatprep.subr.mxu0 %v1482
        %1520 = vmatpush1.msra.mxu0 %v1481
        %1521 = vmatprep.subr.mxu0 %v1484
        %1522 = vmatpush1.msra.mxu0 %v1483
        %1523 = vmatprep.subr.mxu0 %v1486
        %1524 = vmatpush1.msra.mxu0 %v1485
        %1525 = vmatprep.subr.mxu0 %v1488
        %1526 = vmatpush1.msra.mxu0 %v1487
        %1527 = vmatprep.subr.mxu0 %v1490
        %1528 = vmatpush1.msra.mxu0 %v1489
        %1529 = vmatprep.subr.mxu0 %v1492
        %1530 = vmatpush1.msra.mxu0 %v1491
        %1531 = vmatprep.subr.mxu0 %v1494
        %1532 = vmatpush1.msra.mxu0 %v1493
        %1533 = vmatprep.subr.mxu0 %v1496
        %1534 = vmatpush1.msra.mxu0 %v1495
        %1535 = vmatprep.subr.mxu0 %v1498
        %1536 = vmatpush1.msra.mxu0 %v1497
        %1537 = vmatprep.subr.mxu0 %v1500
        %1538 = vmatpush1.msra.mxu0 %v1499
        %1539 = vmatprep.subr.mxu0 %v1513
        %1540 = vmatpush1.msra.mxu0 %v1510
        %1541 = vmatprep.subr.mxu0 0.0
        %1542 = vmatpush1.msra.mxu0 0.0
        %1543 = vmatprep.subr.mxu0 0.0
        %1544 = vmatpush1.msra.mxu0 0.0
        %1545 = vmatprep.subr.mxu0 0.0
        %1546 = vmatpush1.msra.mxu0 0.0
        %1547 = vmatprep.subr.mxu0 0.0
        %1548 = vmatpush1.msra.mxu0 0.0
        %1549 = vmatprep.subr.mxu0 0.0
        %1550 = vmatpush1.msra.mxu0 0.0
        %1551 = vmatprep.subr.mxu0 0.0
        %1552 = vmatpush1.msra.mxu0 0.0
        %1553 = vmatprep.subr.mxu0 0.0
        %1554 = vmatpush1.msra.mxu0 0.0
        %1555 = vmatprep.subr.mxu0 0.0
        %1556 = vmatpush1.msra.mxu0 0.0
        %1557 = vmatprep.subr.mxu0 0.0
        %1558 = vmatpush1.msra.mxu0 0.0
        %1559 = vmatprep.subr.mxu0 0.0
        %1560 = vmatpush1.msra.mxu0 0.0
        %1561 = vmatprep.subr.mxu0 0.0
        %1562 = vmatpush1.msra.mxu0 0.0
        %1563 = vmatprep.subr.mxu0 0.0
        %1564 = vmatpush1.msra.mxu0 0.0
        %1565 = vmatprep.subr.mxu0 0.0
        %1566 = vmatpush1.msra.mxu0 0.0
        %1567 = vmatprep.subr.mxu0 0.0
        %1568 = vmatpush1.msra.mxu0 0.0
        %1569 = vmatprep.subr.mxu0 0.0
        %1570 = vmatpush1.msra.mxu0 0.0
        %1571 = vmatprep.subr.mxu0 0.0
        %1572 = vmatpush1.msra.mxu0 0.0
        %1573 = vmatprep.subr.mxu0 0.0
        %1574 = vmatpush1.msra.mxu0 0.0
        %1575 = vmatprep.subr.mxu0 0.0
        %1576 = vmatpush1.msra.mxu0 0.0
        %1577 = vmatprep.subr.mxu0 0.0
        %1578 = vmatpush1.msra.mxu0 0.0
        %1579 = vmatprep.mubr.f32.mxu0 0.0
        %1580 = vmatmul.mubr.f32.gmra.mrb[0].mxu0 %v1504
        %v1581 = vpop.f32.mrb[0].mxu0
        %v1582 = vadd.f32 0.0, %v1581
        %v1583 = vpop.f32.mrb[0].mxu0
        %v1584 = vadd.f32 0.0, %v1583
        %1585 = vmatprep.mubr.f32.mxu0 0.0
        %1586 = vmatmul.mubr.f32.gmra.mrb[0].mxu0 %v1507
        %v1587 = vpop.f32.mrb[0].mxu0
        %v1588 = vadd.f32 0.0, %v1587
        %v1589 = vpop.f32.mrb[0].mxu0
        %v1590 = vadd.f32 0.0, %v1589
        %1591 = vdwg.mxu0
        %v1592 = vld [vmem:[%s16] sm:$0x3]
        %v1594 = vlaneseq
        %v1595 = vshrl.u32 %v1594, 7
        %v1596 = vsub.s32 0, %v1595
        %v1597 = vrot.slane %v1592, %v1596
        %v1598 = vlaneseq
        %v1599 = vshrl.u32 %v1598, 7
        %v1600 = vsub.s32 1, %v1599
        %v1601 = vrot.slane %v1592, %v1600
        %v1604 = vmul.f32 %v1582, %v1597
        %v1605 = vmul.f32 %v1584, %v1601
        %v1606 = vmul.f32 %v1588, %v1597
        %v1607 = vmul.f32 %v1590, %v1601
        %v1608 = vld [vmem:[%s17] sm:$0x3]
        %v1610 = vlaneseq
        %v1611 = vshrl.u32 %v1610, 7
        %v1612 = vsub.s32 0, %v1611
        %v1613 = vrot.slane %v1608, %v1612
        %v1614 = vlaneseq
        %v1615 = vshrl.u32 %v1614, 7
        %v1616 = vsub.s32 1, %v1615
        %v1617 = vrot.slane %v1608, %v1616
        %v1620 = vadd.f32 %v1604, %v1613
        %v1621 = vadd.f32 %v1605, %v1617
        %v1622 = vadd.f32 %v1606, %v1613
        %v1623 = vadd.f32 %v1607, %v1617
        %v1624 = vmax.f32 %v1620, 0.0
        %v1625 = vmax.f32 %v1621, 0.0
        %v1626 = vmax.f32 %v1622, 0.0
        %v1627 = vmax.f32 %v1623, 0.0
        %v1628 = vld [vmem:[#allocation19] sm:$0xff]
        %v1629 = vld [vmem:[#allocation19 + $0x8] sm:$0xff]
        %v1630 = vld [vmem:[#allocation19 + $0x10] sm:$0xff]
        %v1631 = vld [vmem:[#allocation19 + $0x18] sm:$0xff]
        %v1632 = vld [vmem:[#allocation19 + $0x20] sm:$0xff]
        %v1633 = vld [vmem:[#allocation19 + $0x28] sm:$0xff]
        %v1634 = vld [vmem:[#allocation19 + $0x30] sm:$0xff]
        %v1635 = vld [vmem:[#allocation19 + $0x38] sm:$0xff]
        %v1636 = vld [vmem:[#allocation19 + $0x40] sm:$0xff]
        %v1637 = vld [vmem:[#allocation19 + $0x48] sm:$0xff]
        %v1638 = vld [vmem:[#allocation19 + $0x50] sm:$0xff]
        %v1639 = vld [vmem:[#allocation19 + $0x58] sm:$0xff]
        %v1640 = vld [vmem:[#allocation19 + $0x60] sm:$0xff]
        %v1641 = vld [vmem:[#allocation19 + $0x68] sm:$0xff]
        %v1642 = vld [vmem:[#allocation19 + $0x70] sm:$0xff]
        %v1643 = vld [vmem:[#allocation19 + $0x78] sm:$0xff]
        %v1644 = vld [vmem:[#allocation19 + $0x80] sm:$0xff]
        %v1645 = vld [vmem:[#allocation19 + $0x88] sm:$0xff]
        %v1646 = vld [vmem:[#allocation19 + $0x90] sm:$0xff]
        %v1647 = vld [vmem:[#allocation19 + $0x98] sm:$0xff]
        %v1648 = vld [vmem:[#allocation19 + $0xa0] sm:$0xff]
        %v1649 = vld [vmem:[#allocation19 + $0xa8] sm:$0xff]
        %v1650 = vld [vmem:[#allocation19 + $0xb0] sm:$0xff]
        %v1651 = vld [vmem:[#allocation19 + $0xb8] sm:$0xff]
        %v1652 = vld [vmem:[#allocation19 + $0xc0] sm:$0xf]
        %v1653 = vld [vmem:[#allocation19 + $0xc8] sm:$0xf]
        %v1655 = vsel %vm1376, %v1652, 0
        %v1658 = vsel %vm1376, %v1653, 0
        %1660 = vmatprep.subr.mxu0 %v1629
        %1661 = vmatpush1.msra.mxu0 %v1628
        %1662 = vmatprep.subr.mxu0 %v1631
        %1663 = vmatpush1.msra.mxu0 %v1630
        %1664 = vmatprep.subr.mxu0 %v1633
        %1665 = vmatpush1.msra.mxu0 %v1632
        %1666 = vmatprep.subr.mxu0 %v1635
        %1667 = vmatpush1.msra.mxu0 %v1634
        %1668 = vmatprep.subr.mxu0 %v1637
        %1669 = vmatpush1.msra.mxu0 %v1636
        %1670 = vmatprep.subr.mxu0 %v1639
        %1671 = vmatpush1.msra.mxu0 %v1638
        %1672 = vmatprep.subr.mxu0 %v1641
        %1673 = vmatpush1.msra.mxu0 %v1640
        %1674 = vmatprep.subr.mxu0 %v1643
        %1675 = vmatpush1.msra.mxu0 %v1642
        %1676 = vmatprep.subr.mxu0 %v1645
        %1677 = vmatpush1.msra.mxu0 %v1644
        %1678 = vmatprep.subr.mxu0 %v1647
        %1679 = vmatpush1.msra.mxu0 %v1646
        %1680 = vmatprep.subr.mxu0 %v1649
        %1681 = vmatpush1.msra.mxu0 %v1648
        %1682 = vmatprep.subr.mxu0 %v1651
        %1683 = vmatpush1.msra.mxu0 %v1650
        %1684 = vmatprep.subr.mxu0 %v1658
        %1685 = vmatpush1.msra.mxu0 %v1655
        %1686 = vmatprep.subr.mxu0 0.0
        %1687 = vmatpush1.msra.mxu0 0.0
        %1688 = vmatprep.subr.mxu0 0.0
        %1689 = vmatpush1.msra.mxu0 0.0
        %1690 = vmatprep.subr.mxu0 0.0
        %1691 = vmatpush1.msra.mxu0 0.0
        %1692 = vmatprep.subr.mxu0 0.0
        %1693 = vmatpush1.msra.mxu0 0.0
        %1694 = vmatprep.subr.mxu0 0.0
        %1695 = vmatpush1.msra.mxu0 0.0
        %1696 = vmatprep.subr.mxu0 0.0
        %1697 = vmatpush1.msra.mxu0 0.0
        %1698 = vmatprep.subr.mxu0 0.0
        %1699 = vmatpush1.msra.mxu0 0.0
        %1700 = vmatprep.subr.mxu0 0.0
        %1701 = vmatpush1.msra.mxu0 0.0
        %1702 = vmatprep.subr.mxu0 0.0
        %1703 = vmatpush1.msra.mxu0 0.0
        %1704 = vmatprep.subr.mxu0 0.0
        %1705 = vmatpush1.msra.mxu0 0.0
        %1706 = vmatprep.subr.mxu0 0.0
        %1707 = vmatpush1.msra.mxu0 0.0
        %1708 = vmatprep.subr.mxu0 0.0
        %1709 = vmatpush1.msra.mxu0 0.0
        %1710 = vmatprep.subr.mxu0 0.0
        %1711 = vmatpush1.msra.mxu0 0.0
        %1712 = vmatprep.subr.mxu0 0.0
        %1713 = vmatpush1.msra.mxu0 0.0
        %1714 = vmatprep.subr.mxu0 0.0
        %1715 = vmatpush1.msra.mxu0 0.0
        %1716 = vmatprep.subr.mxu0 0.0
        %1717 = vmatpush1.msra.mxu0 0.0
        %1718 = vmatprep.subr.mxu0 0.0
        %1719 = vmatpush1.msra.mxu0 0.0
        %1720 = vmatprep.subr.mxu0 0.0
        %1721 = vmatpush1.msra.mxu0 0.0
        %1722 = vmatprep.subr.mxu0 0.0
        %1723 = vmatpush1.msra.mxu0 0.0
        %1724 = vmatprep.mubr.f32.mxu0 0.0
        %1725 = vmatmul.mubr.f32.gmra.mrb[0].mxu0 %v1504
        %v1726 = vpop.f32.mrb[0].mxu0
        %v1727 = vadd.f32 0.0, %v1726
        %v1728 = vpop.f32.mrb[0].mxu0
        %v1729 = vadd.f32 0.0, %v1728
        %1730 = vmatprep.mubr.f32.mxu0 0.0
        %1731 = vmatmul.mubr.f32.gmra.mrb[0].mxu0 %v1507
        %v1732 = vpop.f32.mrb[0].mxu0
        %v1733 = vadd.f32 0.0, %v1732
        %v1734 = vpop.f32.mrb[0].mxu0
        %v1735 = vadd.f32 0.0, %v1734
        %1736 = vdwg.mxu0
        %v1737 = vsub.f32 %v1727, %v1624
        %v1738 = vsub.f32 %v1729, %v1625
        %v1739 = vsub.f32 %v1733, %v1626
        %v1740 = vsub.f32 %v1735, %v1627
        %v1741 = vld [vmem:[#allocation21] sm:$0xff]
        %v1742 = vld [vmem:[#allocation21 + $0x8] sm:$0xff]
        %v1743 = vld [vmem:[#allocation21 + $0x10] sm:$0xff]
        %v1744 = vld [vmem:[#allocation21 + $0x18] sm:$0xff]
        %v1745 = vld [vmem:[#allocation21 + $0x20] sm:$0xff]
        %v1746 = vld [vmem:[#allocation21 + $0x28] sm:$0xff]
        %v1747 = vld [vmem:[#allocation21 + $0x30] sm:$0xff]
        %v1748 = vld [vmem:[#allocation21 + $0x38] sm:$0xff]
        %v1749 = vld [vmem:[#allocation21 + $0x40] sm:$0xff]
        %v1750 = vld [vmem:[#allocation21 + $0x48] sm:$0xff]
        %v1751 = vld [vmem:[#allocation21 + $0x50] sm:$0xff]
        %v1752 = vld [vmem:[#allocation21 + $0x58] sm:$0xff]
        %v1753 = vld [vmem:[#allocation21 + $0x60] sm:$0xff]
        %v1754 = vld [vmem:[#allocation21 + $0x68] sm:$0xff]
        %v1755 = vld [vmem:[#allocation21 + $0x70] sm:$0xff]
        %v1756 = vld [vmem:[#allocation21 + $0x78] sm:$0xff]
        %v1757 = vld [vmem:[#allocation21 + $0x80] sm:$0xff]
        %v1758 = vld [vmem:[#allocation21 + $0x88] sm:$0xff]
        %v1759 = vld [vmem:[#allocation21 + $0x90] sm:$0xff]
        %v1760 = vld [vmem:[#allocation21 + $0x98] sm:$0xff]
        %v1761 = vld [vmem:[#allocation21 + $0xa0] sm:$0xff]
        %v1762 = vld [vmem:[#allocation21 + $0xa8] sm:$0xff]
        %v1763 = vld [vmem:[#allocation21 + $0xb0] sm:$0xff]
        %v1764 = vld [vmem:[#allocation21 + $0xb8] sm:$0xff]
        %v1765 = vld [vmem:[#allocation21 + $0xc0] sm:$0xff]
        %v1766 = vld [vmem:[#allocation21 + $0xc8] sm:$0xff]
        %v1767 = vld [vmem:[#allocation21 + $0xd0] sm:$0xff]
        %v1768 = vld [vmem:[#allocation21 + $0xd8] sm:$0xff]
        %v1769 = vld [vmem:[#allocation21 + $0xe0] sm:$0xff]
        %v1770 = vld [vmem:[#allocation21 + $0xe8] sm:$0xff]
        %v1771 = vld [vmem:[#allocation21 + $0xf0] sm:$0xff]
        %v1772 = vld [vmem:[#allocation21 + $0xf8] sm:$0xff]
        %v1773 = vld [vmem:[#allocation21 + $0x100] sm:$0xff]
        %v1774 = vld [vmem:[#allocation21 + $0x108] sm:$0xff]
        %v1775 = vld [vmem:[#allocation21 + $0x110] sm:$0xff]
        %v1776 = vld [vmem:[#allocation21 + $0x118] sm:$0xff]
        %v1777 = vld [vmem:[#allocation21 + $0x120] sm:$0xff]
        %v1778 = vld [vmem:[#allocation21 + $0x128] sm:$0xff]
        %v1779 = vld [vmem:[#allocation21 + $0x130] sm:$0xff]
        %v1780 = vld [vmem:[#allocation21 + $0x138] sm:$0xff]
        %v1781 = vld [vmem:[#allocation21 + $0x140] sm:$0xff]
        %v1782 = vld [vmem:[#allocation21 + $0x148] sm:$0xff]
        %v1783 = vld [vmem:[#allocation21 + $0x150] sm:$0xff]
        %v1784 = vld [vmem:[#allocation21 + $0x158] sm:$0xff]
        %v1785 = vld [vmem:[#allocation21 + $0x160] sm:$0xff]
        %v1786 = vld [vmem:[#allocation21 + $0x168] sm:$0xff]
        %v1787 = vld [vmem:[#allocation21 + $0x170] sm:$0xff]
        %v1788 = vld [vmem:[#allocation21 + $0x178] sm:$0xff]
        %v1789 = vld [vmem:[#allocation21 + $0x180] sm:$0xff]
        %v1790 = vld [vmem:[#allocation21 + $0x188] sm:$0xff]
        %v1791 = vld [vmem:[#allocation21 + $0x190] sm:$0xff]
        %v1792 = vld [vmem:[#allocation21 + $0x198] sm:$0xff]
        %v1793 = vld [vmem:[#allocation21 + $0x1a0] sm:$0xff]
        %v1794 = vld [vmem:[#allocation21 + $0x1a8] sm:$0xff]
        %v1795 = vld [vmem:[#allocation21 + $0x1b0] sm:$0xff]
        %v1796 = vld [vmem:[#allocation21 + $0x1b8] sm:$0xff]
        %v1797 = vld [vmem:[#allocation21 + $0x1c0] sm:$0xff]
        %v1798 = vld [vmem:[#allocation21 + $0x1c8] sm:$0xff]
        %v1799 = vld [vmem:[#allocation21 + $0x1d0] sm:$0xff]
        %v1800 = vld [vmem:[#allocation21 + $0x1d8] sm:$0xff]
        %v1801 = vld [vmem:[#allocation21 + $0x1e0] sm:$0xff]
        %v1802 = vld [vmem:[#allocation21 + $0x1e8] sm:$0xff]
        %v1803 = vld [vmem:[#allocation21 + $0x1f0] sm:$0x3]
        %v1804 = vld [vmem:[#allocation21 + $0x1f8] sm:$0x3]
        %vm1805 = vcmask 998400
        %v1807 = vsel %vm1805, %v1738, 0
        %v1810 = vsel %vm1805, %v1740, 0
        %vm1812 = vcmask 1041408
        %v1814 = vsel %vm1812, %v1803, 0
        %v1817 = vsel %vm1812, %v1804, 0
        %1819 = vmatprep.subr.mxu0 %v1742
        %1820 = vmatpush1.msra.mxu0 %v1741
        %1821 = vmatprep.subr.mxu0 %v1744
        %1822 = vmatpush1.msra.mxu0 %v1743
        %1823 = vmatprep.subr.mxu0 %v1746
        %1824 = vmatpush1.msra.mxu0 %v1745
        %1825 = vmatprep.subr.mxu0 %v1748
        %1826 = vmatpush1.msra.mxu0 %v1747
        %1827 = vmatprep.subr.mxu0 %v1750
        %1828 = vmatpush1.msra.mxu0 %v1749
        %1829 = vmatprep.subr.mxu0 %v1752
        %1830 = vmatpush1.msra.mxu0 %v1751
        %1831 = vmatprep.subr.mxu0 %v1754
        %1832 = vmatpush1.msra.mxu0 %v1753
        %1833 = vmatprep.subr.mxu0 %v1756
        %1834 = vmatpush1.msra.mxu0 %v1755
        %1835 = vmatprep.subr.mxu0 %v1758
        %1836 = vmatpush1.msra.mxu0 %v1757
        %1837 = vmatprep.subr.mxu0 %v1760
        %1838 = vmatpush1.msra.mxu0 %v1759
        %1839 = vmatprep.subr.mxu0 %v1762
        %1840 = vmatpush1.msra.mxu0 %v1761
        %1841 = vmatprep.subr.mxu0 %v1764
        %1842 = vmatpush1.msra.mxu0 %v1763
        %1843 = vmatprep.subr.mxu0 %v1766
        %1844 = vmatpush1.msra.mxu0 %v1765
        %1845 = vmatprep.subr.mxu0 %v1768
        %1846 = vmatpush1.msra.mxu0 %v1767
        %1847 = vmatprep.subr.mxu0 %v1770
        %1848 = vmatpush1.msra.mxu0 %v1769
        %1849 = vmatprep.subr.mxu0 %v1772
        %1850 = vmatpush1.msra.mxu0 %v1771
        %1851 = vmatprep.subr.mxu0 %v1774
        %1852 = vmatpush1.msra.mxu0 %v1773
        %1853 = vmatprep.subr.mxu0 %v1776
        %1854 = vmatpush1.msra.mxu0 %v1775
        %1855 = vmatprep.subr.mxu0 %v1778
        %1856 = vmatpush1.msra.mxu0 %v1777
        %1857 = vmatprep.subr.mxu0 %v1780
        %1858 = vmatpush1.msra.mxu0 %v1779
        %1859 = vmatprep.subr.mxu0 %v1782
        %1860 = vmatpush1.msra.mxu0 %v1781
        %1861 = vmatprep.subr.mxu0 %v1784
        %1862 = vmatpush1.msra.mxu0 %v1783
        %1863 = vmatprep.subr.mxu0 %v1786
        %1864 = vmatpush1.msra.mxu0 %v1785
        %1865 = vmatprep.subr.mxu0 %v1788
        %1866 = vmatpush1.msra.mxu0 %v1787
        %1867 = vmatprep.subr.mxu0 %v1790
        %1868 = vmatpush1.msra.mxu0 %v1789
        %1869 = vmatprep.subr.mxu0 %v1792
        %1870 = vmatpush1.msra.mxu0 %v1791
        %1871 = vmatprep.subr.mxu0 %v1794
        %1872 = vmatpush1.msra.mxu0 %v1793
        %1873 = vmatprep.subr.mxu0 %v1796
        %1874 = vmatpush1.msra.mxu0 %v1795
        %1875 = vmatprep.subr.mxu0 %v1798
        %1876 = vmatpush1.msra.mxu0 %v1797
        %1877 = vmatprep.subr.mxu0 %v1800
        %1878 = vmatpush1.msra.mxu0 %v1799
        %1879 = vmatprep.subr.mxu0 %v1802
        %1880 = vmatpush1.msra.mxu0 %v1801
        %1881 = vmatprep.subr.mxu0 %v1817
        %1882 = vmatpush1.msra.mxu0 %v1814
        %1883 = vmatprep.mubr.f32.mxu0 %v1807
        %1884 = vmatmul.mubr.f32.gmra.mrb[0].mxu0 %v1737
        %v1885 = vpop.f32.mrb[0].mxu0
        %v1886 = vadd.f32 0.0, %v1885
        %v1887 = vpop.f32.mrb[0].mxu0
        %v1888 = vadd.f32 0.0, %v1887
        %1889 = vmatprep.mubr.f32.mxu0 %v1810
        %1890 = vmatmul.mubr.f32.gmra.mrb[0].mxu0 %v1739
        %v1891 = vpop.f32.mrb[0].mxu0
        %v1892 = vadd.f32 0.0, %v1891
        %v1893 = vpop.f32.mrb[0].mxu0
        %v1894 = vadd.f32 0.0, %v1893
        %1895 = vdwg.mxu0
        %v1896 = vld [vmem:[%s20] sm:$0x3]
        %v1898 = vlaneseq
        %v1899 = vshrl.u32 %v1898, 7
        %v1900 = vsub.s32 0, %v1899
        %v1901 = vrot.slane %v1896, %v1900
        %v1902 = vlaneseq
        %v1903 = vshrl.u32 %v1902, 7
        %v1904 = vsub.s32 1, %v1903
        %v1905 = vrot.slane %v1896, %v1904
        %v1908 = vmul.f32 %v1886, %v1901
        %v1909 = vmul.f32 %v1888, %v1905
        %v1910 = vmul.f32 %v1892, %v1901
        %v1911 = vmul.f32 %v1894, %v1905
        %v1912 = vld [vmem:[%s21] sm:$0x3]
        %v1914 = vlaneseq
        %v1915 = vshrl.u32 %v1914, 7
        %v1916 = vsub.s32 0, %v1915
        %v1917 = vrot.slane %v1912, %v1916
        %v1918 = vlaneseq
        %v1919 = vshrl.u32 %v1918, 7
        %v1920 = vsub.s32 1, %v1919
        %v1921 = vrot.slane %v1912, %v1920
        %v1924 = vadd.f32 %v1908, %v1917
        %v1925 = vadd.f32 %v1909, %v1921
        %v1926 = vadd.f32 %v1910, %v1917
        %v1927 = vadd.f32 %v1911, %v1921
        %v1928 = vmax.f32 %v1924, 0.0
        %v1929 = vmax.f32 %v1925, 0.0
        %v1930 = vmax.f32 %v1926, 0.0
        %v1931 = vmax.f32 %v1927, 0.0
        %v1932 = vadd.f32 %v1624, %v1928
        %v1933 = vadd.f32 %v1625, %v1929
        %v1934 = vadd.f32 %v1626, %v1930
        %v1935 = vadd.f32 %v1627, %v1931
        %1936 = vst [vmem:[%s872] sm:$0xff] %v1932
        %1937 = vst.msk [vmem:[%s872 + $0x8] sm:$0xff] %vm1805, %v1933
        %1938 = vst [vmem:[%s872 + $0x10] sm:$0xff] %v1934
        %1939 = vst.msk [vmem:[%s872 + $0x18] sm:$0xff] %vm1805, %v1935
        %s1940 = smul.u32 2, %s42
        %p1941 = scmp.lt.s32.totalorder %s1940, 3
        %s1942 = scalar_select %p1941, %s1940, 3
        %s1943 = smul.addr %s1942, 2
        %s1944 = smul.addr %s1943, 8
        %s1945 = scalar_lea.vmem %s22, %s1944
        // Predicated region
        $region161: #{lifting_net_forward.2} parent=107 // pred_check
          %p1946 = pneg %p527
        $region162: #{lifting_net_forward.2} parent=107 // pred_check_branch
          %1948 = sbr.rel (%p1946) target = $region164
        $region163: #{lifting_net_forward.2} parent=107 // pred_region
          %s1949 = smul.u32 2, %s42
        $region164: #{lifting_net_forward.2} parent=107 // pred_fallthru
          _
      $region108: #{lifting_net_forward.2} parent=5 // pred_fallthru
        _
      %p1950 = scmp.le.s32.totalorder 2, %s37
      // Predicated region
      $region165: #{lifting_net_forward.2} parent=5 // pred_check
        %p1951 = pneg %p1950
      $region166: #{lifting_net_forward.2} parent=5 // pred_check_branch
        %1953 = sbr.rel (%p1951) target = $region168
      $region167: #{lifting_net_forward.2} parent=5 // pred_region
        %s1954 = ssub.s32 %s37, 2
        // Predicated region
        $region169: #{lifting_net_forward.2} parent=167 // pred_check
          %p1955 = pneg %p533
        $region170: #{lifting_net_forward.2} parent=167 // pred_check_branch
          %1957 = sbr.rel (%p1955) target = $region172
        $region171: #{lifting_net_forward.2} parent=167 // pred_region
          %s1958 = smul.u32 2, %s43
          %p1959 = scmp.lt.s32.totalorder %s1958, 3
          %s1960 = scalar_select %p1959, %s1958, 3
          %s1961 = smul.addr %s1960, 2
          %s1962 = smul.addr %s1961, 8
          %s1963 = scalar_lea.vmem %s22, %s1962
        $region172: #{lifting_net_forward.2} parent=167 // pred_fallthru
          _
      $region168: #{lifting_net_forward.2} parent=5 // pred_fallthru
        _
    $region6: #{lifting_net_forward.2} parent=1 // loop_footer
      %s41 = sadd.s32 1, %s37
    $region7: #{lifting_net_forward.2} parent=1 // loop_footer_branch
      %36 = sbr.rel target = $region3
    $region8: #{lifting_net_forward.2} parent=1 // loop_exit
      _
    %1964 = vsyncpa [#allocation3], 1
    %s1965 = scalar_lea.sflag [#allocation3], 1
    %1966 = vsyncpa %s1965, 1
    %1967 = vsyncpa [#allocation5], 1
    %1968 = vsyncpa [#allocation8], 1
    %1969 = vsyncpa [#allocation11], 1
    %1970 = vsyncpa [#allocation14], 1
    %1971 = vsyncpa [#allocation17], 1
    %1972 = vsyncpa [#allocation20], 1

</llo_original>
